<compile_context>
chip_gen: v7x
topology: tpu7x:2x2x1
jax: 0.10.0
libtpu: 0.0.40
codegen_flags: <defaults>
</compile_context>

<pallas_src>
import functools
import math

import jax
import jax.numpy as jnp
from jax.experimental import pallas as pl
from jax.experimental.pallas import tpu as pltpu

HIDDEN = 256


def _round_up(x, m):
    return ((x + m - 1) // m) * m


def _policy_kernel(state_ref, eps_ref, w1_ref, b1_ref, w2_ref, b2_ref,
                   wh_ref, bh_ref,
                   raw_mean_ref, mean_ref, log_std_ref, pi_ref, logp_ref,
                   *, n_actions, log_std_min, log_std_max, act_lim):
    # Feature-major layout: activations are [features, batch_tile]; the batch
    # dimension is the lane axis, so all stores are lane-dense and the
    # elementwise tail runs at full vreg occupancy even though n_actions << 128.
    x = state_ref[...].astype(jnp.bfloat16)                          # (A, TB)

    # actorNet: Linear(A, 256) + ReLU + Linear(256, 256) + ReLU.
    # bf16 operands on the MXU, f32 accumulation.
    h1 = jnp.dot(w1_ref[...], x,
                 preferred_element_type=jnp.float32) + b1_ref[...]   # (256, TB)
    h1 = jnp.maximum(h1, 0.0)
    h2 = jnp.dot(w2_ref[...], h1.astype(jnp.bfloat16),
                 preferred_element_type=jnp.float32) + b2_ref[...]   # (256, TB)
    h2 = jnp.maximum(h2, 0.0)

    # Fused mean/log_std heads: one (2A, 256) x (256, TB) matmul.
    heads = jnp.dot(wh_ref[...], h2.astype(jnp.bfloat16),
                    preferred_element_type=jnp.float32) + bh_ref[...]  # (2A, TB)
    mean = heads[:n_actions, :]
    log_std_raw = heads[n_actions:2 * n_actions, :]

    # tanh(log_std.detach()) then Squash([-1, 1] -> [log_std_min, log_std_max]).
    t = jnp.tanh(log_std_raw)
    log_std = log_std_min + (t + 1.0) * 0.5 * (log_std_max - log_std_min)

    # DiagonalGaussianSample (reparameterized): pi = mean + exp(log_std) * eps.
    std = jnp.exp(log_std)
    eps = eps_ref[...]
    pi = mean + std * eps

    tanh_pi = jnp.tanh(pi)
    tanh_mean = jnp.tanh(mean)

    # TanhDiagonalGaussianLogProb:
    #   gaussian log-prob - sum_a log(1 - tanh(pi)^2)
    # via the stable identity log(1 - tanh(z)^2) = 2*(log 2 - z - softplus(-2z)).
    log_two_pi = math.log(2.0 * math.pi)
    gauss_lp = -0.5 * (eps * eps + 2.0 * log_std + log_two_pi)
    z = -2.0 * pi
    softplus_z = jnp.maximum(z, 0.0) + jnp.log1p(jnp.exp(-jnp.abs(z)))
    correction = 2.0 * (math.log(2.0) - pi - softplus_z)
    # NOTE: the reference computes log-prob of the *unscaled* tanh sample, so
    # no -sum(log(act_lim)) change-of-variables term is added here.
    log_prob = jnp.sum(gauss_lp - correction, axis=0, keepdims=True)  # (1, TB)

    raw_mean_ref[...] = mean
    mean_ref[...] = tanh_mean * act_lim
    log_std_ref[...] = log_std
    pi_ref[...] = tanh_pi * act_lim
    logp_ref[...] = log_prob


def cont_gaussian_forward(state, params, eps, *, log_std_min, log_std_max,
                          act_lim, block_b=None):
    """state, eps: [B, A] float32.  Returns 5 arrays matching PolicyOpsCont."""
    B, A = state.shape
    assert eps.shape == (B, A)

    # bf16 weights (cast once, halves weight DMA); biases stay f32 and are
    # stored as [out, 1] columns so they lane-broadcast over the batch axis.
    w1 = params["w1"].astype(jnp.bfloat16)                       # (256, A)
    w2 = params["w2"].astype(jnp.bfloat16)                       # (256, 256)
    wh = jnp.concatenate([params["wm"], params["ws"]],
                         axis=0).astype(jnp.bfloat16)            # (2A, 256)
    b1 = params["b1"]                                            # (256, 1)
    b2 = params["b2"]                                            # (256, 1)
    bh = jnp.concatenate([params["bm"], params["bs"]], axis=0)   # (2A, 1)

    # Batch tile: multiple of 128 (batch is the lane axis of every block) and
    # large enough to amortize per-step pipeline overhead.  Always >= 2 grid
    # steps so the "parallel" axis can be split across v7x's two TensorCores.
    if block_b is None:
        block_b = min(1024, max(128, _round_up((B + 1) // 2, 128)))
    block_b = max(128, _round_up(block_b, 128))
    b_pad = _round_up(B, block_b)
    if b_pad // block_b < 2:
        b_pad = 2 * block_b
    grid = (b_pad // block_b,)

    # Feature-major inputs: [A, b_pad], zero padding on the batch axis.
    state_t = jnp.zeros((A, b_pad), jnp.float32).at[:, :B].set(state.T)
    eps_t = jnp.zeros((A, b_pad), jnp.float32).at[:, :B].set(eps.T)

    kern = functools.partial(
        _policy_kernel,
        n_actions=A,
        log_std_min=float(log_std_min),
        log_std_max=float(log_std_max),
        act_lim=float(act_lim),
    )

    def batch_spec(rows):
        return pl.BlockSpec((rows, block_b), lambda i: (0, i))

    def full_spec(shape):
        # Constant index map -> weights stay VMEM-resident (no re-DMA per step).
        return pl.BlockSpec(shape, lambda i: (0, 0))

    in_specs = [
        batch_spec(A),                 # state (feature-major)
        batch_spec(A),                 # eps
        full_spec((HIDDEN, A)),        # w1 (bf16)
        full_spec((HIDDEN, 1)),        # b1
        full_spec((HIDDEN, HIDDEN)),   # w2 (bf16)
        full_spec((HIDDEN, 1)),        # b2
        full_spec((2 * A, HIDDEN)),    # wh (bf16, fused heads)
        full_spec((2 * A, 1)),         # bh
    ]
    out_specs = (
        batch_spec(A),   # raw_mean
        batch_spec(A),   # scaled tanh(mean)
        batch_spec(A),   # log_std
        batch_spec(A),   # scaled tanh(pi)
        batch_spec(1),   # log_prob_pi
    )
    out_shape = (
        jax.ShapeDtypeStruct((A, b_pad), jnp.float32),
        jax.ShapeDtypeStruct((A, b_pad), jnp.float32),
        jax.ShapeDtypeStruct((A, b_pad), jnp.float32),
        jax.ShapeDtypeStruct((A, b_pad), jnp.float32),
        jax.ShapeDtypeStruct((1, b_pad), jnp.float32),
    )

    flops = 2 * b_pad * (A * HIDDEN + HIDDEN * HIDDEN + HIDDEN * 2 * A)
    transcendentals = b_pad * A * 6  # tanh x3, exp x2, log1p x1 (approx.)
    bytes_accessed = (
        4 * 2 * b_pad * A                                          # state + eps (f32)
        + 2 * (A * HIDDEN + HIDDEN * HIDDEN + HIDDEN * 2 * A)      # bf16 weights
        + 4 * (2 * HIDDEN + 2 * A)                                 # f32 biases
        + 4 * b_pad * (4 * A + 1)                                  # outputs (exact payload)
    )

    outs = pl.pallas_call(
        kern,
        out_shape=out_shape,
        grid=grid,
        in_specs=in_specs,
        out_specs=out_specs,
        compiler_params=pltpu.CompilerParams(
            dimension_semantics=("parallel",)),
        cost_estimate=pl.CostEstimate(
            flops=flops,
            transcendentals=transcendentals,
            bytes_accessed=bytes_accessed),
    )(state_t, eps_t, w1, b1, w2, b2, wh, bh)

    raw_mean_t, mean_t, log_std_t, pi_t, logp_t = outs
    raw_mean = raw_mean_t[:, :B].T
    scaled_tanh_mean = mean_t[:, :B].T
    log_std = log_std_t[:, :B].T
    scaled_tanh_pi = pi_t[:, :B].T
    log_prob_pi = logp_t[:, :B].T
    return raw_mean, scaled_tanh_mean, log_std, scaled_tanh_pi, log_prob_pi


def init_params(key, n_actions, hidden=HIDDEN):
    """PyTorch Linear default init (U[-1/sqrt(fan_in), 1/sqrt(fan_in)]).
    Weights stored PyTorch-native [out, in]; biases as [out, 1] columns."""
    ks = jax.random.split(key, 8)

    def lin(kw, kb, fan_in, fan_out):
        bound = 1.0 / math.sqrt(fan_in)
        w = jax.random.uniform(kw, (fan_out, fan_in), jnp.float32, -bound, bound)
        b = jax.random.uniform(kb, (fan_out, 1), jnp.float32, -bound, bound)
        return w, b

    w1, b1 = lin(ks[0], ks[1], n_actions, hidden)
    w2, b2 = lin(ks[2], ks[3], hidden, hidden)
    wm, bm = lin(ks[4], ks[5], hidden, n_actions)
    ws, bs = lin(ks[6], ks[7], hidden, n_actions)
    return {"w1": w1, "b1": b1, "w2": w2, "b2": b2,
            "wm": wm, "bm": bm, "ws": ws, "bs": bs}


if __name__ == "__main__":
    key = jax.random.PRNGKey(0)
    k_param, k_state, k_eps = jax.random.split(key, 3)

    batch = 8
    n_actions = 4
    log_std_min = -20.0
    log_std_max = 2.0
    act_lim = 1.0  # args.bound

    params = init_params(k_param, n_actions)
    # NB: the module's actorNet consumes an input of width n_actions.
    state = jax.random.normal(k_state, (batch, n_actions), jnp.float32)
    eps = jax.random.normal(k_eps, (batch, n_actions), jnp.float32)

    outs = cont_gaussian_forward(
        state, params, eps,
        log_std_min=log_std_min, log_std_max=log_std_max, act_lim=act_lim,
    )
    outs = jax.block_until_ready(outs)
    raw_mean, scaled_tanh_mean, log_std, scaled_tanh_pi, log_prob_pi = outs

    # Pure-JAX f32 reference (module semantics).  Tolerance is loose because
    # the kernel runs its matmuls in bf16 with f32 accumulation.
    def ref_forward(state, params, eps):
        h1 = jax.nn.relu(state @ params["w1"].T + params["b1"][:, 0])
        h2 = jax.nn.relu(h1 @ params["w2"].T + params["b2"][:, 0])
        mean = h2 @ params["wm"].T + params["bm"][:, 0]
        log_std_raw = h2 @ params["ws"].T + params["bs"][:, 0]
        t = jnp.tanh(log_std_raw)
        ls = log_std_min + (t + 1.0) * 0.5 * (log_std_max - log_std_min)
        pi = mean + jnp.exp(ls) * eps
        tanh_pi = jnp.tanh(pi)
        gauss_lp = -0.5 * (eps * eps + 2.0 * ls + math.log(2.0 * math.pi))
        z = -2.0 * pi
        sp = jnp.maximum(z, 0.0) + jnp.log1p(jnp.exp(-jnp.abs(z)))
        corr = 2.0 * (math.log(2.0) - pi - sp)
        logp = jnp.sum(gauss_lp - corr, axis=-1, keepdims=True)
        return (mean, jnp.tanh(mean) * act_lim, ls, tanh_pi * act_lim, logp)

    refs = ref_forward(state, params, eps)
    for got, want in zip(outs, refs):
        assert got.shape == want.shape
        assert bool(jnp.all(jnp.isfinite(got)))
        assert bool(jnp.allclose(got, want, atol=1e-1, rtol=5e-2)), (
            float(jnp.max(jnp.abs(got - want))))

    assert raw_mean.shape == (batch, n_actions)
    assert log_prob_pi.shape == (batch, 1)
    assert bool(jnp.all(log_std >= log_std_min)) and bool(jnp.all(log_std <= log_std_max))
    assert bool(jnp.all(jnp.abs(scaled_tanh_pi) <= act_lim + 1e-6))

    print("KERNEL_OK")
</pallas_src>

<mosaic_0001>
module attributes {stable_mosaic.version = 11 : i64} {
  func.func @_policy_kernel(%arg0: i32, %arg1: memref<4x128xf32, #tpu.memory_space<vmem>>, %arg2: memref<4x128xf32, #tpu.memory_space<vmem>>, %arg3: memref<256x4xbf16, #tpu.memory_space<vmem>>, %arg4: memref<256x1xf32, #tpu.memory_space<vmem>>, %arg5: memref<256x256xbf16, #tpu.memory_space<vmem>>, %arg6: memref<256x1xf32, #tpu.memory_space<vmem>>, %arg7: memref<8x256xbf16, #tpu.memory_space<vmem>>, %arg8: memref<8x1xf32, #tpu.memory_space<vmem>>, %arg9: memref<4x128xf32, #tpu.memory_space<vmem>>, %arg10: memref<4x128xf32, #tpu.memory_space<vmem>>, %arg11: memref<4x128xf32, #tpu.memory_space<vmem>>, %arg12: memref<4x128xf32, #tpu.memory_space<vmem>>, %arg13: memref<1x128xf32, #tpu.memory_space<vmem>>) attributes {dimension_semantics = [#tpu.dimension_semantics<parallel>], iteration_bounds = array<i64: 2>, scalar_prefetch = 0 : i64, scratch_operands = 0 : i64, tpu.core_type = #tpu.core_type<tc>, window_params = [{transform_indices = @transform_0, window_bounds = array<i64: 4, 128>}, {transform_indices = @transform_1, window_bounds = array<i64: 4, 128>}, {pipeline_mode = #tpu.pipeline_mode<synchronous>, transform_indices = @transform_2, window_bounds = array<i64: 256, 4>}, {pipeline_mode = #tpu.pipeline_mode<synchronous>, transform_indices = @transform_3, window_bounds = array<i64: 256, 1>}, {pipeline_mode = #tpu.pipeline_mode<synchronous>, transform_indices = @transform_4, window_bounds = array<i64: 256, 256>}, {pipeline_mode = #tpu.pipeline_mode<synchronous>, transform_indices = @transform_5, window_bounds = array<i64: 256, 1>}, {pipeline_mode = #tpu.pipeline_mode<synchronous>, transform_indices = @transform_6, window_bounds = array<i64: 8, 256>}, {pipeline_mode = #tpu.pipeline_mode<synchronous>, transform_indices = @transform_7, window_bounds = array<i64: 8, 1>}, {transform_indices = @transform_8, window_bounds = array<i64: 4, 128>}, {transform_indices = @transform_9, window_bounds = array<i64: 4, 128>}, {transform_indices = @transform_10, window_bounds = array<i64: 4, 128>}, {transform_indices = @transform_11, window_bounds = array<i64: 4, 128>}, {transform_indices = @transform_12, window_bounds = array<i64: 1, 128>}]} {
    %c0 = arith.constant 0 : index
    %c0_0 = arith.constant 0 : index
    %0 = vector.load %arg1[%c0, %c0_0] : memref<4x128xf32, #tpu.memory_space<vmem>>, vector<4x128xf32>
    %1 = arith.truncf %0 : vector<4x128xf32> to vector<4x128xbf16>
    %c0_1 = arith.constant 0 : index
    %c0_2 = arith.constant 0 : index
    %2 = vector.load %arg3[%c0_1, %c0_2] : memref<256x4xbf16, #tpu.memory_space<vmem>>, vector<256x4xbf16>
    %cst = arith.constant dense<0.000000e+00> : vector<256x128xf32>
    %3 = tpu.matmul %2, %1, %cst {dimension_numbers = #tpu.dot_dimension_numbers<[1], [0], [0], [1], [0, 0, 1, 1], [], []>} : vector<256x4xbf16>, vector<4x128xbf16>, vector<256x128xf32> -> vector<256x128xf32>
    %c0_3 = arith.constant 0 : index
    %c0_4 = arith.constant 0 : index
    %4 = vector.load %arg4[%c0_3, %c0_4] : memref<256x1xf32, #tpu.memory_space<vmem>>, vector<256x1xf32>
    %5 = vector.broadcast %4 : vector<256x1xf32> to vector<256x128xf32>
    %6 = arith.addf %3, %5 : vector<256x128xf32>
    %cst_5 = arith.constant 0.000000e+00 : f32
    %7 = vector.broadcast %cst_5 : f32 to vector<256x128xf32>
    %8 = arith.maximumf %6, %7 : vector<256x128xf32>
    %c0_6 = arith.constant 0 : index
    %c0_7 = arith.constant 0 : index
    %9 = vector.load %arg5[%c0_6, %c0_7] : memref<256x256xbf16, #tpu.memory_space<vmem>>, vector<256x256xbf16>
    %10 = arith.truncf %8 : vector<256x128xf32> to vector<256x128xbf16>
    %cst_8 = arith.constant dense<0.000000e+00> : vector<256x128xf32>
    %11 = tpu.matmul %9, %10, %cst_8 {dimension_numbers = #tpu.dot_dimension_numbers<[1], [0], [0], [1], [0, 0, 1, 1], [], []>} : vector<256x256xbf16>, vector<256x128xbf16>, vector<256x128xf32> -> vector<256x128xf32>
    %c0_9 = arith.constant 0 : index
    %c0_10 = arith.constant 0 : index
    %12 = vector.load %arg6[%c0_9, %c0_10] : memref<256x1xf32, #tpu.memory_space<vmem>>, vector<256x1xf32>
    %13 = vector.broadcast %12 : vector<256x1xf32> to vector<256x128xf32>
    %14 = arith.addf %11, %13 : vector<256x128xf32>
    %cst_11 = arith.constant 0.000000e+00 : f32
    %15 = vector.broadcast %cst_11 : f32 to vector<256x128xf32>
    %16 = arith.maximumf %14, %15 : vector<256x128xf32>
    %c0_12 = arith.constant 0 : index
    %c0_13 = arith.constant 0 : index
    %17 = vector.load %arg7[%c0_12, %c0_13] : memref<8x256xbf16, #tpu.memory_space<vmem>>, vector<8x256xbf16>
    %18 = arith.truncf %16 : vector<256x128xf32> to vector<256x128xbf16>
    %cst_14 = arith.constant dense<0.000000e+00> : vector<8x128xf32>
    %19 = tpu.matmul %17, %18, %cst_14 {dimension_numbers = #tpu.dot_dimension_numbers<[1], [0], [0], [1], [0, 0, 1, 1], [], []>} : vector<8x256xbf16>, vector<256x128xbf16>, vector<8x128xf32> -> vector<8x128xf32>
    %c0_15 = arith.constant 0 : index
    %c0_16 = arith.constant 0 : index
    %20 = vector.load %arg8[%c0_15, %c0_16] : memref<8x1xf32, #tpu.memory_space<vmem>>, vector<8x1xf32>
    %21 = vector.broadcast %20 : vector<8x1xf32> to vector<8x128xf32>
    %22 = arith.addf %19, %21 : vector<8x128xf32>
    %23 = vector.extract_strided_slice %22 {offsets = [0, 0], sizes = [4, 128], strides = [1, 1]} : vector<8x128xf32> to vector<4x128xf32>
    %24 = vector.extract_strided_slice %22 {offsets = [4, 0], sizes = [4, 128], strides = [1, 1]} : vector<8x128xf32> to vector<4x128xf32>
    %25 = math.tanh %24 : vector<4x128xf32>
    %cst_17 = arith.constant 1.000000e+00 : f32
    %26 = vector.broadcast %cst_17 : f32 to vector<4x128xf32>
    %27 = arith.addf %25, %26 : vector<4x128xf32>
    %cst_18 = arith.constant 5.000000e-01 : f32
    %28 = vector.broadcast %cst_18 : f32 to vector<4x128xf32>
    %29 = arith.mulf %27, %28 : vector<4x128xf32>
    %cst_19 = arith.constant 2.200000e+01 : f32
    %30 = vector.broadcast %cst_19 : f32 to vector<4x128xf32>
    %31 = arith.mulf %29, %30 : vector<4x128xf32>
    %cst_20 = arith.constant -2.000000e+01 : f32
    %32 = vector.broadcast %cst_20 : f32 to vector<4x128xf32>
    %33 = arith.addf %32, %31 : vector<4x128xf32>
    %34 = math.exp %33 : vector<4x128xf32>
    %c0_21 = arith.constant 0 : index
    %c0_22 = arith.constant 0 : index
    %35 = vector.load %arg2[%c0_21, %c0_22] : memref<4x128xf32, #tpu.memory_space<vmem>>, vector<4x128xf32>
    %36 = arith.mulf %34, %35 : vector<4x128xf32>
    %37 = arith.addf %23, %36 : vector<4x128xf32>
    %38 = math.tanh %37 : vector<4x128xf32>
    %39 = math.tanh %23 : vector<4x128xf32>
    %40 = arith.mulf %35, %35 : vector<4x128xf32>
    %cst_23 = arith.constant 2.000000e+00 : f32
    %41 = vector.broadcast %cst_23 : f32 to vector<4x128xf32>
    %42 = arith.mulf %41, %33 : vector<4x128xf32>
    %43 = arith.addf %40, %42 : vector<4x128xf32>
    %cst_24 = arith.constant 1.83787704 : f32
    %44 = vector.broadcast %cst_24 : f32 to vector<4x128xf32>
    %45 = arith.addf %43, %44 : vector<4x128xf32>
    %cst_25 = arith.constant -5.000000e-01 : f32
    %46 = vector.broadcast %cst_25 : f32 to vector<4x128xf32>
    %47 = arith.mulf %46, %45 : vector<4x128xf32>
    %cst_26 = arith.constant -2.000000e+00 : f32
    %48 = vector.broadcast %cst_26 : f32 to vector<4x128xf32>
    %49 = arith.mulf %48, %37 : vector<4x128xf32>
    %cst_27 = arith.constant 0.000000e+00 : f32
    %50 = vector.broadcast %cst_27 : f32 to vector<4x128xf32>
    %51 = arith.maximumf %49, %50 : vector<4x128xf32>
    %52 = math.absf %49 : vector<4x128xf32>
    %cst_28 = arith.constant 0.000000e+00 : f32
    %53 = vector.broadcast %cst_28 : f32 to vector<4x128xf32>
    %54 = arith.subf %53, %52 : vector<4x128xf32>
    %55 = math.exp %54 : vector<4x128xf32>
    %56 = math.log1p %55 : vector<4x128xf32>
    %57 = arith.addf %51, %56 : vector<4x128xf32>
    %cst_29 = arith.constant 0.693147182 : f32
    %58 = vector.broadcast %cst_29 : f32 to vector<4x128xf32>
    %59 = arith.subf %58, %37 : vector<4x128xf32>
    %60 = arith.subf %59, %57 : vector<4x128xf32>
    %cst_30 = arith.constant 2.000000e+00 : f32
    %61 = vector.broadcast %cst_30 : f32 to vector<4x128xf32>
    %62 = arith.mulf %61, %60 : vector<4x128xf32>
    %63 = arith.subf %47, %62 : vector<4x128xf32>
    %cst_31 = arith.constant dense<0.000000e+00> : vector<128xf32>
    %64 = vector.multi_reduction <add>, %63, %cst_31 [0] : vector<4x128xf32> to vector<128xf32>
    %65 = vector.shape_cast %64 : vector<128xf32> to vector<1x128xf32>
    %c0_32 = arith.constant 0 : index
    %c0_33 = arith.constant 0 : index
    %66 = vector.load %arg9[%c0_32, %c0_33] : memref<4x128xf32, #tpu.memory_space<vmem>>, vector<4x128xf32>
    tpu.vector_store %arg9[%c0_32, %c0_33], %23 {strides = array<i32>} : memref<4x128xf32, #tpu.memory_space<vmem>>, vector<4x128xf32>,
    %cst_34 = arith.constant 1.000000e+00 : f32
    %67 = vector.broadcast %cst_34 : f32 to vector<4x128xf32>
    %68 = arith.mulf %39, %67 : vector<4x128xf32>
    %c0_35 = arith.constant 0 : index
    %c0_36 = arith.constant 0 : index
    %69 = vector.load %arg10[%c0_35, %c0_36] : memref<4x128xf32, #tpu.memory_space<vmem>>, vector<4x128xf32>
    tpu.vector_store %arg10[%c0_35, %c0_36], %68 {strides = array<i32>} : memref<4x128xf32, #tpu.memory_space<vmem>>, vector<4x128xf32>,
    %c0_37 = arith.constant 0 : index
    %c0_38 = arith.constant 0 : index
    %70 = vector.load %arg11[%c0_37, %c0_38] : memref<4x128xf32, #tpu.memory_space<vmem>>, vector<4x128xf32>
    tpu.vector_store %arg11[%c0_37, %c0_38], %33 {strides = array<i32>} : memref<4x128xf32, #tpu.memory_space<vmem>>, vector<4x128xf32>,
    %cst_39 = arith.constant 1.000000e+00 : f32
    %71 = vector.broadcast %cst_39 : f32 to vector<4x128xf32>
    %72 = arith.mulf %38, %71 : vector<4x128xf32>
    %c0_40 = arith.constant 0 : index
    %c0_41 = arith.constant 0 : index
    %73 = vector.load %arg12[%c0_40, %c0_41] : memref<4x128xf32, #tpu.memory_space<vmem>>, vector<4x128xf32>
    tpu.vector_store %arg12[%c0_40, %c0_41], %72 {strides = array<i32>} : memref<4x128xf32, #tpu.memory_space<vmem>>, vector<4x128xf32>,
    %c0_42 = arith.constant 0 : index
    %c0_43 = arith.constant 0 : index
    %74 = vector.load %arg13[%c0_42, %c0_43] : memref<1x128xf32, #tpu.memory_space<vmem>>, vector<1x128xf32>
    tpu.vector_store %arg13[%c0_42, %c0_43], %65 {strides = array<i32>} : memref<1x128xf32, #tpu.memory_space<vmem>>, vector<1x128xf32>,
    return
  }
  func.func @transform_0(%arg0: i32) -> (i32, i32) {
    %c0_i32 = arith.constant 0 : i32
    %c0_i32_0 = arith.constant 0 : i32
    return %c0_i32, %arg0 : i32, i32
  }
  func.func @transform_1(%arg0: i32) -> (i32, i32) {
    %c0_i32 = arith.constant 0 : i32
    %c0_i32_0 = arith.constant 0 : i32
    return %c0_i32, %arg0 : i32, i32
  }
  func.func @transform_2(%arg0: i32) -> (i32, i32) {
    %c0_i32 = arith.constant 0 : i32
    %c0_i32_0 = arith.constant 0 : i32
    %c0_i32_1 = arith.constant 0 : i32
    return %c0_i32, %c0_i32_0 : i32, i32
  }
  func.func @transform_3(%arg0: i32) -> (i32, i32) {
    %c0_i32 = arith.constant 0 : i32
    %c0_i32_0 = arith.constant 0 : i32
    %c0_i32_1 = arith.constant 0 : i32
    return %c0_i32, %c0_i32_0 : i32, i32
  }
  func.func @transform_4(%arg0: i32) -> (i32, i32) {
    %c0_i32 = arith.constant 0 : i32
    %c0_i32_0 = arith.constant 0 : i32
    %c0_i32_1 = arith.constant 0 : i32
    return %c0_i32, %c0_i32_0 : i32, i32
  }
  func.func @transform_5(%arg0: i32) -> (i32, i32) {
    %c0_i32 = arith.constant 0 : i32
    %c0_i32_0 = arith.constant 0 : i32
    %c0_i32_1 = arith.constant 0 : i32
    return %c0_i32, %c0_i32_0 : i32, i32
  }
  func.func @transform_6(%arg0: i32) -> (i32, i32) {
    %c0_i32 = arith.constant 0 : i32
    %c0_i32_0 = arith.constant 0 : i32
    %c0_i32_1 = arith.constant 0 : i32
    return %c0_i32, %c0_i32_0 : i32, i32
  }
  func.func @transform_7(%arg0: i32) -> (i32, i32) {
    %c0_i32 = arith.constant 0 : i32
    %c0_i32_0 = arith.constant 0 : i32
    %c0_i32_1 = arith.constant 0 : i32
    return %c0_i32, %c0_i32_0 : i32, i32
  }
  func.func @transform_8(%arg0: i32) -> (i32, i32) {
    %c0_i32 = arith.constant 0 : i32
    %c0_i32_0 = arith.constant 0 : i32
    return %c0_i32, %arg0 : i32, i32
  }
  func.func @transform_9(%arg0: i32) -> (i32, i32) {
    %c0_i32 = arith.constant 0 : i32
    %c0_i32_0 = arith.constant 0 : i32
    return %c0_i32, %arg0 : i32, i32
  }
  func.func @transform_10(%arg0: i32) -> (i32, i32) {
    %c0_i32 = arith.constant 0 : i32
    %c0_i32_0 = arith.constant 0 : i32
    return %c0_i32, %arg0 : i32, i32
  }
  func.func @transform_11(%arg0: i32) -> (i32, i32) {
    %c0_i32 = arith.constant 0 : i32
    %c0_i32_0 = arith.constant 0 : i32
    return %c0_i32, %arg0 : i32, i32
  }
  func.func @transform_12(%arg0: i32) -> (i32, i32) {
    %c0_i32 = arith.constant 0 : i32
    %c0_i32_0 = arith.constant 0 : i32
    return %c0_i32, %arg0 : i32, i32
  }
}

</mosaic_0001>

<llo_original>
// kernel: tpu_custom_call.1
$region0: #{tpu_custom_call.1}
  #allocation0 [shape = 'u32[]', space=smem, size = 0x4, offset = 0x4, fixed_abs, tag = 'smem constant byte address 0x4 - core index']
  #allocation1 [shape = 'u32[144,128]{1,0:T(1,128)}', space=vmem, size = 0x12000, scoped, tag = 'internal scratch']
  %s0 = inlined_call_operand.vmem [shape: f32[4,256], index: 0, kind: input, shape index: {}]
  %s1 = inlined_call_operand.vmem [shape: f32[4,256], index: 1, kind: input, shape index: {}]
  %s2 = inlined_call_operand.vmem [shape: bf16[256,4], index: 2, kind: input, shape index: {}]
  %s3 = inlined_call_operand.vmem [shape: f32[256,1], index: 3, kind: input, shape index: {}]
  %s4 = inlined_call_operand.vmem [shape: bf16[256,256], index: 4, kind: input, shape index: {}]
  %s5 = inlined_call_operand.vmem [shape: f32[256,1], index: 5, kind: input, shape index: {}]
  %s6 = inlined_call_operand.vmem [shape: bf16[8,256], index: 6, kind: input, shape index: {}]
  %s7 = inlined_call_operand.vmem [shape: f32[8,1], index: 7, kind: input, shape index: {}]
  %s8 = inlined_call_operand.hbm [shape: f32[4,256], index: 8, kind: output, shape index: {0}]
  %s9 = inlined_call_operand.hbm [shape: f32[4,256], index: 9, kind: output, shape index: {1}]
  %s10 = inlined_call_operand.hbm [shape: f32[4,256], index: 10, kind: output, shape index: {2}]
  %s11 = inlined_call_operand.hbm [shape: f32[4,256], index: 11, kind: output, shape index: {3}]
  %s12 = inlined_call_operand.hbm [shape: f32[1,256], index: 12, kind: output, shape index: {4}]
  %13 = xla_tuple %s8, %s9, %s10, %s11, %s12
  %s14 = sld [smem:[#allocation0]]
  $region97: #{tpu_custom_call.1} parent=0
    _
  %s16 = ssub.s32 1, %s14
  %s17 = scalar_select 0, %s16, %s14
  $region1: #{tpu_custom_call.1} parent=0
    #allocation2 [shape = 'u8[4096]{0}', space=vmem, size = 0x1000, scoped, tag = 'output window, operand 0']
    #allocation3 [shape = 's32[2]{0}', space=sflag, size = 0x8, scoped, tag = 'scoped memory for tpu_custom_call.1']
    #allocation4 [shape = 'u8[4096]{0}', space=vmem, size = 0x1000, scoped, tag = 'output window, operand 1']
    #allocation5 [shape = 's32[2]{0}', space=sflag, size = 0x8, scoped, tag = 'scoped memory for tpu_custom_call.1']
    #allocation6 [shape = 'u8[4096]{0}', space=vmem, size = 0x1000, scoped, tag = 'output window, operand 2']
    #allocation7 [shape = 'u8[4096]{0}', space=vmem, size = 0x1000, scoped, tag = 'output window, operand 3']
    #allocation8 [shape = 's32[2]{0}', space=sflag, size = 0x8, scoped, tag = 'scoped memory for tpu_custom_call.1']
    #allocation9 [shape = 'u8[1024]{0}', space=vmem, size = 0x400, scoped, tag = 'output window, operand 4']
    %18 = vsyncpa [#allocation3], 0
    %s19 = scalar_lea.sflag [#allocation3], 1
    %20 = vsyncpa %s19, 0
    %21 = vsyncpa [#allocation5], 0
    %s22 = scalar_lea.sflag [#allocation5], 1
    %23 = vsyncpa %s22, 0
    %24 = vsyncpa [#allocation8], 0
    %s25 = scalar_lea.sflag [#allocation8], 1
    %26 = vsyncpa %s25, 0
    loop: start=0, step=1, limit=4
    $region2: #{tpu_custom_call.1} parent=1 // loop_pre_header
      _
    $region3: #{tpu_custom_call.1} parent=1 // loop_header
      %s28 = sphi 0, %s32
      %p29 = scmp.ge.s32.totalorder %s28, 4
      %s38 = sphi 0, %s40
      %s41 = sphi 0, %s38
      %s42 = sphi 0, %s41
      %s58 = sphi 0, %s42
      %s64 = sphi 0, %s66
      %s67 = sphi 0, %s64
      %s68 = sphi 0, %s67
      %s84 = sphi 0, %s68
      %s88 = sphi 0, %s88
      %s90 = sphi 0, %s88
      %s91 = sphi 0, %s90
      %s105 = sphi 0, %s91
      %s109 = sphi 0, %s109
      %s111 = sphi 0, %s109
      %s112 = sphi 0, %s111
      %s126 = sphi 0, %s112
      %s130 = sphi 0, %s130
      %s132 = sphi 0, %s130
      %s133 = sphi 0, %s132
      %s147 = sphi 0, %s133
      %s151 = sphi 0, %s151
      %s153 = sphi 0, %s151
      %s154 = sphi 0, %s153
      %s168 = sphi 0, %s154
      %s172 = sphi 0, %s172
      %s174 = sphi 0, %s172
      %s175 = sphi 0, %s174
      %s189 = sphi 0, %s175
      %s193 = sphi 0, %s193
      %s195 = sphi 0, %s193
      %s196 = sphi 0, %s195
      %s210 = sphi 0, %s196
      %s216 = sphi 0, %s218
      %s219 = sphi 0, %s216
      %s220 = sphi 0, %s219
      %s236 = sphi 0, %s220
      %s242 = sphi 0, %s244
      %s245 = sphi 0, %s242
      %s246 = sphi 0, %s245
      %s262 = sphi 0, %s246
      %s268 = sphi 0, %s270
      %s271 = sphi 0, %s268
      %s272 = sphi 0, %s271
      %s288 = sphi 0, %s272
      %s294 = sphi 0, %s296
      %s297 = sphi 0, %s294
      %s298 = sphi 0, %s297
      %s314 = sphi 0, %s298
      %s320 = sphi 0, %s322
      %s323 = sphi 0, %s320
      %s324 = sphi 0, %s323
      %s340 = sphi 0, %s324
    $region4: #{tpu_custom_call.1} parent=1 // loop_header_branch
      %31 = sbr.rel (%p29) target = $region8
    $region5: #{tpu_custom_call.1} parent=1 // loop_body
      %s33 = ssub.s32 %s28, 1
      %s34 = ssub.s32 %s28, 2
      %s35 = sadd.s32 %s28, 1
      %s36 = ssub.s32 %s28, %s35
      %p37 = scmp.eq.s32.totalorder %s36, 0
      %s39 = sadd.s32 %s38, 1
      %s40 = scalar_select %p37, %s38, %s39
      %p43 = pneg %p37
      %p44 = scmp.eq.s32.totalorder %s28, 1
      %p45 = por %p43, %p44
      %p46 = scmp.ne.s32.totalorder %s38, %s41
      %p47 = scmp.eq.s32.totalorder %s28, 0
      %p48 = por %p46, %p47
      %p49 = scmp.ne.s32.totalorder %s38, %s41
      %p50 = scmp.eq.s32.totalorder %s33, 1
      %p51 = por %p49, %p50
      %p52 = scmp.ne.s32.totalorder %s41, %s42
      %p53 = scmp.eq.s32.totalorder %s33, 0
      %p54 = por %p52, %p53
      %p55 = scmp.ne.s32.totalorder %s41, %s42
      %p56 = scmp.eq.s32.totalorder %s34, 1
      %p57 = por %p55, %p56
      %p59 = scmp.ne.s32.totalorder %s42, %s58
      %p60 = scmp.eq.s32.totalorder %s34, 0
      %p61 = por %p59, %p60
      %s62 = ssub.s32 %s28, %s35
      %p63 = scmp.eq.s32.totalorder %s62, 0
      %s65 = sadd.s32 %s64, 1
      %s66 = scalar_select %p63, %s64, %s65
      %p69 = pneg %p63
      %p70 = scmp.eq.s32.totalorder %s28, 1
      %p71 = por %p69, %p70
      %p72 = scmp.ne.s32.totalorder %s64, %s67
      %p73 = scmp.eq.s32.totalorder %s28, 0
      %p74 = por %p72, %p73
      %p75 = scmp.ne.s32.totalorder %s64, %s67
      %p76 = scmp.eq.s32.totalorder %s33, 1
      %p77 = por %p75, %p76
      %p78 = scmp.ne.s32.totalorder %s67, %s68
      %p79 = scmp.eq.s32.totalorder %s33, 0
      %p80 = por %p78, %p79
      %p81 = scmp.ne.s32.totalorder %s67, %s68
      %p82 = scmp.eq.s32.totalorder %s34, 1
      %p83 = por %p81, %p82
      %p85 = scmp.ne.s32.totalorder %s68, %s84
      %p86 = scmp.eq.s32.totalorder %s34, 0
      %p87 = por %p85, %p86
      %s89 = sadd.s32 %s88, 1
      %p92 = scmp.eq.s32.totalorder %s28, 1
      %p93 = scmp.ne.s32.totalorder %s88, %s90
      %p94 = scmp.eq.s32.totalorder %s28, 0
      %p95 = por %p93, %p94
      %p96 = scmp.ne.s32.totalorder %s88, %s90
      %p97 = scmp.eq.s32.totalorder %s33, 1
      %p98 = por %p96, %p97
      %p99 = scmp.ne.s32.totalorder %s90, %s91
      %p100 = scmp.eq.s32.totalorder %s33, 0
      %p101 = por %p99, %p100
      %p102 = scmp.ne.s32.totalorder %s90, %s91
      %p103 = scmp.eq.s32.totalorder %s34, 1
      %p104 = por %p102, %p103
      %p106 = scmp.ne.s32.totalorder %s91, %s105
      %p107 = scmp.eq.s32.totalorder %s34, 0
      %p108 = por %p106, %p107
      %s110 = sadd.s32 %s109, 1
      %p113 = scmp.eq.s32.totalorder %s28, 1
      %p114 = scmp.ne.s32.totalorder %s109, %s111
      %p115 = scmp.eq.s32.totalorder %s28, 0
      %p116 = por %p114, %p115
      %p117 = scmp.ne.s32.totalorder %s109, %s111
      %p118 = scmp.eq.s32.totalorder %s33, 1
      %p119 = por %p117, %p118
      %p120 = scmp.ne.s32.totalorder %s111, %s112
      %p121 = scmp.eq.s32.totalorder %s33, 0
      %p122 = por %p120, %p121
      %p123 = scmp.ne.s32.totalorder %s111, %s112
      %p124 = scmp.eq.s32.totalorder %s34, 1
      %p125 = por %p123, %p124
      %p127 = scmp.ne.s32.totalorder %s112, %s126
      %p128 = scmp.eq.s32.totalorder %s34, 0
      %p129 = por %p127, %p128
      %s131 = sadd.s32 %s130, 1
      %p134 = scmp.eq.s32.totalorder %s28, 1
      %p135 = scmp.ne.s32.totalorder %s130, %s132
      %p136 = scmp.eq.s32.totalorder %s28, 0
      %p137 = por %p135, %p136
      %p138 = scmp.ne.s32.totalorder %s130, %s132
      %p139 = scmp.eq.s32.totalorder %s33, 1
      %p140 = por %p138, %p139
      %p141 = scmp.ne.s32.totalorder %s132, %s133
      %p142 = scmp.eq.s32.totalorder %s33, 0
      %p143 = por %p141, %p142
      %p144 = scmp.ne.s32.totalorder %s132, %s133
      %p145 = scmp.eq.s32.totalorder %s34, 1
      %p146 = por %p144, %p145
      %p148 = scmp.ne.s32.totalorder %s133, %s147
      %p149 = scmp.eq.s32.totalorder %s34, 0
      %p150 = por %p148, %p149
      %s152 = sadd.s32 %s151, 1
      %p155 = scmp.eq.s32.totalorder %s28, 1
      %p156 = scmp.ne.s32.totalorder %s151, %s153
      %p157 = scmp.eq.s32.totalorder %s28, 0
      %p158 = por %p156, %p157
      %p159 = scmp.ne.s32.totalorder %s151, %s153
      %p160 = scmp.eq.s32.totalorder %s33, 1
      %p161 = por %p159, %p160
      %p162 = scmp.ne.s32.totalorder %s153, %s154
      %p163 = scmp.eq.s32.totalorder %s33, 0
      %p164 = por %p162, %p163
      %p165 = scmp.ne.s32.totalorder %s153, %s154
      %p166 = scmp.eq.s32.totalorder %s34, 1
      %p167 = por %p165, %p166
      %p169 = scmp.ne.s32.totalorder %s154, %s168
      %p170 = scmp.eq.s32.totalorder %s34, 0
      %p171 = por %p169, %p170
      %s173 = sadd.s32 %s172, 1
      %p176 = scmp.eq.s32.totalorder %s28, 1
      %p177 = scmp.ne.s32.totalorder %s172, %s174
      %p178 = scmp.eq.s32.totalorder %s28, 0
      %p179 = por %p177, %p178
      %p180 = scmp.ne.s32.totalorder %s172, %s174
      %p181 = scmp.eq.s32.totalorder %s33, 1
      %p182 = por %p180, %p181
      %p183 = scmp.ne.s32.totalorder %s174, %s175
      %p184 = scmp.eq.s32.totalorder %s33, 0
      %p185 = por %p183, %p184
      %p186 = scmp.ne.s32.totalorder %s174, %s175
      %p187 = scmp.eq.s32.totalorder %s34, 1
      %p188 = por %p186, %p187
      %p190 = scmp.ne.s32.totalorder %s175, %s189
      %p191 = scmp.eq.s32.totalorder %s34, 0
      %p192 = por %p190, %p191
      %s194 = sadd.s32 %s193, 1
      %p197 = scmp.eq.s32.totalorder %s28, 1
      %p198 = scmp.ne.s32.totalorder %s193, %s195
      %p199 = scmp.eq.s32.totalorder %s28, 0
      %p200 = por %p198, %p199
      %p201 = scmp.ne.s32.totalorder %s193, %s195
      %p202 = scmp.eq.s32.totalorder %s33, 1
      %p203 = por %p201, %p202
      %p204 = scmp.ne.s32.totalorder %s195, %s196
      %p205 = scmp.eq.s32.totalorder %s33, 0
      %p206 = por %p204, %p205
      %p207 = scmp.ne.s32.totalorder %s195, %s196
      %p208 = scmp.eq.s32.totalorder %s34, 1
      %p209 = por %p207, %p208
      %p211 = scmp.ne.s32.totalorder %s196, %s210
      %p212 = scmp.eq.s32.totalorder %s34, 0
      %p213 = por %p211, %p212
      %s214 = ssub.s32 %s28, %s35
      %p215 = scmp.eq.s32.totalorder %s214, 0
      %s217 = sadd.s32 %s216, 1
      %s218 = scalar_select %p215, %s216, %s217
      %p221 = pneg %p215
      %p222 = scmp.eq.s32.totalorder %s28, 1
      %p223 = por %p221, %p222
      %p224 = scmp.ne.s32.totalorder %s216, %s219
      %p225 = scmp.eq.s32.totalorder %s28, 0
      %p226 = por %p224, %p225
      %p227 = scmp.ne.s32.totalorder %s216, %s219
      %p228 = scmp.eq.s32.totalorder %s33, 1
      %p229 = por %p227, %p228
      %p230 = scmp.ne.s32.totalorder %s219, %s220
      %p231 = scmp.eq.s32.totalorder %s33, 0
      %p232 = por %p230, %p231
      %p233 = scmp.ne.s32.totalorder %s219, %s220
      %p234 = scmp.eq.s32.totalorder %s34, 1
      %p235 = por %p233, %p234
      %p237 = scmp.ne.s32.totalorder %s220, %s236
      %p238 = scmp.eq.s32.totalorder %s34, 0
      %p239 = por %p237, %p238
      %s240 = ssub.s32 %s28, %s35
      %p241 = scmp.eq.s32.totalorder %s240, 0
      %s243 = sadd.s32 %s242, 1
      %s244 = scalar_select %p241, %s242, %s243
      %p247 = pneg %p241
      %p248 = scmp.eq.s32.totalorder %s28, 1
      %p249 = por %p247, %p248
      %p250 = scmp.ne.s32.totalorder %s242, %s245
      %p251 = scmp.eq.s32.totalorder %s28, 0
      %p252 = por %p250, %p251
      %p253 = scmp.ne.s32.totalorder %s242, %s245
      %p254 = scmp.eq.s32.totalorder %s33, 1
      %p255 = por %p253, %p254
      %p256 = scmp.ne.s32.totalorder %s245, %s246
      %p257 = scmp.eq.s32.totalorder %s33, 0
      %p258 = por %p256, %p257
      %p259 = scmp.ne.s32.totalorder %s245, %s246
      %p260 = scmp.eq.s32.totalorder %s34, 1
      %p261 = por %p259, %p260
      %p263 = scmp.ne.s32.totalorder %s246, %s262
      %p264 = scmp.eq.s32.totalorder %s34, 0
      %p265 = por %p263, %p264
      %s266 = ssub.s32 %s28, %s35
      %p267 = scmp.eq.s32.totalorder %s266, 0
      %s269 = sadd.s32 %s268, 1
      %s270 = scalar_select %p267, %s268, %s269
      %p273 = pneg %p267
      %p274 = scmp.eq.s32.totalorder %s28, 1
      %p275 = por %p273, %p274
      %p276 = scmp.ne.s32.totalorder %s268, %s271
      %p277 = scmp.eq.s32.totalorder %s28, 0
      %p278 = por %p276, %p277
      %p279 = scmp.ne.s32.totalorder %s268, %s271
      %p280 = scmp.eq.s32.totalorder %s33, 1
      %p281 = por %p279, %p280
      %p282 = scmp.ne.s32.totalorder %s271, %s272
      %p283 = scmp.eq.s32.totalorder %s33, 0
      %p284 = por %p282, %p283
      %p285 = scmp.ne.s32.totalorder %s271, %s272
      %p286 = scmp.eq.s32.totalorder %s34, 1
      %p287 = por %p285, %p286
      %p289 = scmp.ne.s32.totalorder %s272, %s288
      %p290 = scmp.eq.s32.totalorder %s34, 0
      %p291 = por %p289, %p290
      %s292 = ssub.s32 %s28, %s35
      %p293 = scmp.eq.s32.totalorder %s292, 0
      %s295 = sadd.s32 %s294, 1
      %s296 = scalar_select %p293, %s294, %s295
      %p299 = pneg %p293
      %p300 = scmp.eq.s32.totalorder %s28, 1
      %p301 = por %p299, %p300
      %p302 = scmp.ne.s32.totalorder %s294, %s297
      %p303 = scmp.eq.s32.totalorder %s28, 0
      %p304 = por %p302, %p303
      %p305 = scmp.ne.s32.totalorder %s294, %s297
      %p306 = scmp.eq.s32.totalorder %s33, 1
      %p307 = por %p305, %p306
      %p308 = scmp.ne.s32.totalorder %s297, %s298
      %p309 = scmp.eq.s32.totalorder %s33, 0
      %p310 = por %p308, %p309
      %p311 = scmp.ne.s32.totalorder %s297, %s298
      %p312 = scmp.eq.s32.totalorder %s34, 1
      %p313 = por %p311, %p312
      %p315 = scmp.ne.s32.totalorder %s298, %s314
      %p316 = scmp.eq.s32.totalorder %s34, 0
      %p317 = por %p315, %p316
      %s318 = ssub.s32 %s28, %s35
      %p319 = scmp.eq.s32.totalorder %s318, 0
      %s321 = sadd.s32 %s320, 1
      %s322 = scalar_select %p319, %s320, %s321
      %p325 = pneg %p319
      %p326 = scmp.eq.s32.totalorder %s28, 1
      %p327 = por %p325, %p326
      %p328 = scmp.ne.s32.totalorder %s320, %s323
      %p329 = scmp.eq.s32.totalorder %s28, 0
      %p330 = por %p328, %p329
      %p331 = scmp.ne.s32.totalorder %s320, %s323
      %p332 = scmp.eq.s32.totalorder %s33, 1
      %p333 = por %p331, %p332
      %p334 = scmp.ne.s32.totalorder %s323, %s324
      %p335 = scmp.eq.s32.totalorder %s33, 0
      %p336 = por %p334, %p335
      %p337 = scmp.ne.s32.totalorder %s323, %s324
      %p338 = scmp.eq.s32.totalorder %s34, 1
      %p339 = por %p337, %p338
      %p341 = scmp.ne.s32.totalorder %s324, %s340
      %p342 = scmp.eq.s32.totalorder %s34, 0
      %p343 = por %p341, %p342
      %p344 = scmp.le.s32.totalorder 1, %s28
      %p345 = scmp.lt.s32.totalorder %s28, 3
      %p346 = pnand %p344, %p345
      %p347 = pneg %p346
      // Predicated region
      $region9: #{tpu_custom_call.1} parent=5 // pred_check
        _
      $region10: #{tpu_custom_call.1} parent=5 // pred_check_branch
        %349 = sbr.rel (%p346) target = $region12
      $region11: #{tpu_custom_call.1} parent=5 // pred_region
        %s350 = ssub.s32 %s28, 1
        // Predicated region
        $region13: #{tpu_custom_call.1} parent=11 // pred_check
          %p351 = pneg %p101
        $region14: #{tpu_custom_call.1} parent=11 // pred_check_branch
          %353 = sbr.rel (%p351) target = $region16
        $region15: #{tpu_custom_call.1} parent=11 // pred_region
          _
        $region16: #{tpu_custom_call.1} parent=11 // pred_fallthru
          _
        // Predicated region
        $region17: #{tpu_custom_call.1} parent=11 // pred_check
          %p354 = pneg %p122
        $region18: #{tpu_custom_call.1} parent=11 // pred_check_branch
          %356 = sbr.rel (%p354) target = $region20
        $region19: #{tpu_custom_call.1} parent=11 // pred_region
          _
        $region20: #{tpu_custom_call.1} parent=11 // pred_fallthru
          _
        // Predicated region
        $region21: #{tpu_custom_call.1} parent=11 // pred_check
          %p357 = pneg %p143
        $region22: #{tpu_custom_call.1} parent=11 // pred_check_branch
          %359 = sbr.rel (%p357) target = $region24
        $region23: #{tpu_custom_call.1} parent=11 // pred_region
          _
        $region24: #{tpu_custom_call.1} parent=11 // pred_fallthru
          _
        // Predicated region
        $region25: #{tpu_custom_call.1} parent=11 // pred_check
          %p360 = pneg %p164
        $region26: #{tpu_custom_call.1} parent=11 // pred_check_branch
          %362 = sbr.rel (%p360) target = $region28
        $region27: #{tpu_custom_call.1} parent=11 // pred_region
          _
        $region28: #{tpu_custom_call.1} parent=11 // pred_fallthru
          _
        // Predicated region
        $region29: #{tpu_custom_call.1} parent=11 // pred_check
          %p363 = pneg %p185
        $region30: #{tpu_custom_call.1} parent=11 // pred_check_branch
          %365 = sbr.rel (%p363) target = $region32
        $region31: #{tpu_custom_call.1} parent=11 // pred_region
          _
        $region32: #{tpu_custom_call.1} parent=11 // pred_fallthru
          _
        // Predicated region
        $region33: #{tpu_custom_call.1} parent=11 // pred_check
          %p366 = pneg %p206
        $region34: #{tpu_custom_call.1} parent=11 // pred_check_branch
          %368 = sbr.rel (%p366) target = $region36
        $region35: #{tpu_custom_call.1} parent=11 // pred_region
          _
        $region36: #{tpu_custom_call.1} parent=11 // pred_fallthru
          _
      $region12: #{tpu_custom_call.1} parent=5 // pred_fallthru
        _
      %p369 = scmp.lt.s32.totalorder %s28, 2
      // Predicated region
      $region37: #{tpu_custom_call.1} parent=5 // pred_check
        %p370 = pneg %p369
      $region38: #{tpu_custom_call.1} parent=5 // pred_check_branch
        %372 = sbr.rel (%p370) target = $region40
      $region39: #{tpu_custom_call.1} parent=5 // pred_region
        // Predicated region
        $region41: #{tpu_custom_call.1} parent=39 // pred_check
          %p373 = pneg %p48
        $region42: #{tpu_custom_call.1} parent=39 // pred_check_branch
          %375 = sbr.rel (%p373) target = $region44
        $region43: #{tpu_custom_call.1} parent=39 // pred_region
          %p376 = scmp.lt.s32.totalorder %s28, 1
          %s377 = scalar_select %p376, %s28, 1
          %s378 = smul.addr %s377, 4
          %s379 = scalar_lea.vmem %s0, %s378
        $region44: #{tpu_custom_call.1} parent=39 // pred_fallthru
          _
        // Predicated region
        $region45: #{tpu_custom_call.1} parent=39 // pred_check
          %p380 = pneg %p74
        $region46: #{tpu_custom_call.1} parent=39 // pred_check_branch
          %382 = sbr.rel (%p380) target = $region48
        $region47: #{tpu_custom_call.1} parent=39 // pred_region
          %p383 = scmp.lt.s32.totalorder %s28, 1
          %s384 = scalar_select %p383, %s28, 1
          %s385 = smul.addr %s384, 4
          %s386 = scalar_lea.vmem %s1, %s385
        $region48: #{tpu_custom_call.1} parent=39 // pred_fallthru
          _
      $region40: #{tpu_custom_call.1} parent=5 // pred_fallthru
        _
      %p387 = scmp.le.s32.totalorder 1, %s28
      %p388 = scmp.lt.s32.totalorder %s28, 3
      %p389 = pnand %p387, %p388
      %p390 = pneg %p389
      // Predicated region
      $region49: #{tpu_custom_call.1} parent=5 // pred_check
        _
      $region50: #{tpu_custom_call.1} parent=5 // pred_check_branch
        %392 = sbr.rel (%p389) target = $region52
      $region51: #{tpu_custom_call.1} parent=5 // pred_region
        %s393 = ssub.s32 %s28, 1
        %p394 = scmp.lt.s32.totalorder %s33, 1
        %s395 = scalar_select %p394, %s33, 1
        %s396 = smul.addr %s395, 4
        %s397 = scalar_lea.vmem %s0, %s396
        %p398 = pneg %p54
        %p399 = pneg %p51
        %p400 = scmp.lt.s32.totalorder %s33, 1
        %s401 = scalar_select %p400, %s33, 1
        %s402 = smul.addr %s401, 4
        %s403 = scalar_lea.vmem %s1, %s402
        %p404 = pneg %p80
        %p405 = pneg %p77
        %p406 = pneg %p101
        %p407 = pneg %p98
        %p408 = pneg %p122
        %p409 = pneg %p119
        %p410 = pneg %p143
        %p411 = pneg %p140
        %p412 = pneg %p164
        %p413 = pneg %p161
        %p414 = pneg %p185
        %p415 = pneg %p182
        %p416 = pneg %p206
        %p417 = pneg %p203
        %p418 = pneg %p232
        %p419 = pneg %p229
        %s420 = sand.u32 %s219, 1
        %s421 = scalar_lea.sflag [#allocation3], %s420
        %s422 = sand.u32 %s219, 1
        %s423 = smul.addr %s422, 4
        %s424 = scalar_lea.vmem [#allocation2], %s423
        %p425 = pneg %p258
        %p426 = pneg %p255
        %s427 = sand.u32 %s33, 1
        %s428 = scalar_lea.sflag [#allocation5], %s427
        %s429 = sand.u32 %s245, 1
        %s430 = smul.addr %s429, 4
        %s431 = scalar_lea.vmem [#allocation4], %s430
        %p432 = pneg %p284
        %p433 = pneg %p281
        %s434 = sand.u32 %s33, 1
        %s435 = scalar_lea.sflag [#allocation5], %s434
        %s436 = sand.u32 %s271, 1
        %s437 = smul.addr %s436, 4
        %s438 = scalar_lea.vmem [#allocation6], %s437
        %p439 = pneg %p310
        %p440 = pneg %p307
        %s441 = sand.u32 %s33, 1
        %s442 = scalar_lea.sflag [#allocation8], %s441
        %s443 = sand.u32 %s297, 1
        %s444 = smul.addr %s443, 4
        %s445 = scalar_lea.vmem [#allocation7], %s444
        %p446 = pneg %p336
        %p447 = pneg %p333
        %s448 = sand.u32 %s33, 1
        %s449 = scalar_lea.sflag [#allocation8], %s448
        %s450 = sand.u32 %s323, 1
        %s451 = scalar_lea.vmem [#allocation9], %s450
        %p452 = scmp.lt.s32.totalorder %s33, 1
        %s453 = scalar_select %p452, %s33, 1
        %s454 = smul.addr %s453, 4
        %s455 = scalar_lea.vmem %s0, %s454
        %p456 = scmp.lt.s32.totalorder %s33, 1
        %s457 = scalar_select %p456, %s33, 1
        %s458 = smul.addr %s457, 4
        %s459 = scalar_lea.vmem %s1, %s458
        %v461 = vld [vmem:[%s455] sm:$0xf]
        %v462 = vpack.c.bf16 %v461, %v461
        %v463 = vld [vmem:[%s2] sm:$0xf]
        %v464 = vld [vmem:[%s2 + $0x4] sm:$0xf]
        %v465 = vld [vmem:[%s2 + $0x8] sm:$0xf]
        %v466 = vld [vmem:[%s2 + $0xc] sm:$0xf]
        %v467 = vld [vmem:[%s2 + $0x10] sm:$0xf]
        %v468 = vld [vmem:[%s2 + $0x14] sm:$0xf]
        %v469 = vld [vmem:[%s2 + $0x18] sm:$0xf]
        %v470 = vld [vmem:[%s2 + $0x1c] sm:$0xf]
        %v471 = vld [vmem:[%s2 + $0x20] sm:$0xf]
        %v472 = vld [vmem:[%s2 + $0x24] sm:$0xf]
        %v473 = vld [vmem:[%s2 + $0x28] sm:$0xf]
        %v474 = vld [vmem:[%s2 + $0x2c] sm:$0xf]
        %v475 = vld [vmem:[%s2 + $0x30] sm:$0xf]
        %v476 = vld [vmem:[%s2 + $0x34] sm:$0xf]
        %v477 = vld [vmem:[%s2 + $0x38] sm:$0xf]
        %v478 = vld [vmem:[%s2 + $0x3c] sm:$0xf]
        %v479 = vld [vmem:[%s2 + $0x40] sm:$0xf]
        %v480 = vld [vmem:[%s2 + $0x44] sm:$0xf]
        %v481 = vld [vmem:[%s2 + $0x48] sm:$0xf]
        %v482 = vld [vmem:[%s2 + $0x4c] sm:$0xf]
        %v483 = vld [vmem:[%s2 + $0x50] sm:$0xf]
        %v484 = vld [vmem:[%s2 + $0x54] sm:$0xf]
        %v485 = vld [vmem:[%s2 + $0x58] sm:$0xf]
        %v486 = vld [vmem:[%s2 + $0x5c] sm:$0xf]
        %v487 = vld [vmem:[%s2 + $0x60] sm:$0xf]
        %v488 = vld [vmem:[%s2 + $0x64] sm:$0xf]
        %v489 = vld [vmem:[%s2 + $0x68] sm:$0xf]
        %v490 = vld [vmem:[%s2 + $0x6c] sm:$0xf]
        %v491 = vld [vmem:[%s2 + $0x70] sm:$0xf]
        %v492 = vld [vmem:[%s2 + $0x74] sm:$0xf]
        %v493 = vld [vmem:[%s2 + $0x78] sm:$0xf]
        %v494 = vld [vmem:[%s2 + $0x7c] sm:$0xf]
        %v495 = vld [vmem:[%s3] sm:$0xff]
        %v496 = vld [vmem:[%s3 + $0x8] sm:$0xff]
        %v497 = vld [vmem:[%s3 + $0x10] sm:$0xff]
        %v498 = vld [vmem:[%s3 + $0x18] sm:$0xff]
        %v499 = vld [vmem:[%s3 + $0x20] sm:$0xff]
        %v500 = vld [vmem:[%s3 + $0x28] sm:$0xff]
        %v501 = vld [vmem:[%s3 + $0x30] sm:$0xff]
        %v502 = vld [vmem:[%s3 + $0x38] sm:$0xff]
        %v503 = vld [vmem:[%s3 + $0x40] sm:$0xff]
        %v504 = vld [vmem:[%s3 + $0x48] sm:$0xff]
        %v505 = vld [vmem:[%s3 + $0x50] sm:$0xff]
        %v506 = vld [vmem:[%s3 + $0x58] sm:$0xff]
        %v507 = vld [vmem:[%s3 + $0x60] sm:$0xff]
        %v508 = vld [vmem:[%s3 + $0x68] sm:$0xff]
        %v509 = vld [vmem:[%s3 + $0x70] sm:$0xff]
        %v510 = vld [vmem:[%s3 + $0x78] sm:$0xff]
        %v511 = vld [vmem:[%s3 + $0x80] sm:$0xff]
        %v512 = vld [vmem:[%s3 + $0x88] sm:$0xff]
        %v513 = vld [vmem:[%s3 + $0x90] sm:$0xff]
        %v514 = vld [vmem:[%s3 + $0x98] sm:$0xff]
        %v515 = vld [vmem:[%s3 + $0xa0] sm:$0xff]
        %v516 = vld [vmem:[%s3 + $0xa8] sm:$0xff]
        %v517 = vld [vmem:[%s3 + $0xb0] sm:$0xff]
        %v518 = vld [vmem:[%s3 + $0xb8] sm:$0xff]
        %v519 = vld [vmem:[%s3 + $0xc0] sm:$0xff]
        %v520 = vld [vmem:[%s3 + $0xc8] sm:$0xff]
        %v521 = vld [vmem:[%s3 + $0xd0] sm:$0xff]
        %v522 = vld [vmem:[%s3 + $0xd8] sm:$0xff]
        %v523 = vld [vmem:[%s3 + $0xe0] sm:$0xff]
        %v524 = vld [vmem:[%s3 + $0xe8] sm:$0xff]
        %v525 = vld [vmem:[%s3 + $0xf0] sm:$0xff]
        %v526 = vld [vmem:[%s3 + $0xf8] sm:$0xff]
        %528 = vset.pattern.permute.xlu0 0
        %529 = vperm.xlu0 %528, %v495
        %v530 = vpop.permute.xlu0 %529
        %533 = vset.pattern.permute.xlu0 0
        %534 = vperm.xlu0 %533, %v496
        %v535 = vpop.permute.xlu0 %534
        %538 = vset.pattern.permute.xlu0 0
        %539 = vperm.xlu0 %538, %v497
        %v540 = vpop.permute.xlu0 %539
        %543 = vset.pattern.permute.xlu0 0
        %544 = vperm.xlu0 %543, %v498
        %v545 = vpop.permute.xlu0 %544
        %548 = vset.pattern.permute.xlu0 0
        %549 = vperm.xlu0 %548, %v499
        %v550 = vpop.permute.xlu0 %549
        %553 = vset.pattern.permute.xlu0 0
        %554 = vperm.xlu0 %553, %v500
        %v555 = vpop.permute.xlu0 %554
        %558 = vset.pattern.permute.xlu0 0
        %559 = vperm.xlu0 %558, %v501
        %v560 = vpop.permute.xlu0 %559
        %563 = vset.pattern.permute.xlu0 0
        %564 = vperm.xlu0 %563, %v502
        %v565 = vpop.permute.xlu0 %564
        %568 = vset.pattern.permute.xlu0 0
        %569 = vperm.xlu0 %568, %v503
        %v570 = vpop.permute.xlu0 %569
        %573 = vset.pattern.permute.xlu0 0
        %574 = vperm.xlu0 %573, %v504
        %v575 = vpop.permute.xlu0 %574
        %578 = vset.pattern.permute.xlu0 0
        %579 = vperm.xlu0 %578, %v505
        %v580 = vpop.permute.xlu0 %579
        %583 = vset.pattern.permute.xlu0 0
        %584 = vperm.xlu0 %583, %v506
        %v585 = vpop.permute.xlu0 %584
        %588 = vset.pattern.permute.xlu0 0
        %589 = vperm.xlu0 %588, %v507
        %v590 = vpop.permute.xlu0 %589
        %593 = vset.pattern.permute.xlu0 0
        %594 = vperm.xlu0 %593, %v508
        %v595 = vpop.permute.xlu0 %594
        %598 = vset.pattern.permute.xlu0 0
        %599 = vperm.xlu0 %598, %v509
        %v600 = vpop.permute.xlu0 %599
        %603 = vset.pattern.permute.xlu0 0
        %604 = vperm.xlu0 %603, %v510
        %v605 = vpop.permute.xlu0 %604
        %608 = vset.pattern.permute.xlu0 0
        %609 = vperm.xlu0 %608, %v511
        %v610 = vpop.permute.xlu0 %609
        %613 = vset.pattern.permute.xlu0 0
        %614 = vperm.xlu0 %613, %v512
        %v615 = vpop.permute.xlu0 %614
        %618 = vset.pattern.permute.xlu0 0
        %619 = vperm.xlu0 %618, %v513
        %v620 = vpop.permute.xlu0 %619
        %623 = vset.pattern.permute.xlu0 0
        %624 = vperm.xlu0 %623, %v514
        %v625 = vpop.permute.xlu0 %624
        %628 = vset.pattern.permute.xlu0 0
        %629 = vperm.xlu0 %628, %v515
        %v630 = vpop.permute.xlu0 %629
        %633 = vset.pattern.permute.xlu0 0
        %634 = vperm.xlu0 %633, %v516
        %v635 = vpop.permute.xlu0 %634
        %638 = vset.pattern.permute.xlu0 0
        %639 = vperm.xlu0 %638, %v517
        %v640 = vpop.permute.xlu0 %639
        %643 = vset.pattern.permute.xlu0 0
        %644 = vperm.xlu0 %643, %v518
        %v645 = vpop.permute.xlu0 %644
        %648 = vset.pattern.permute.xlu0 0
        %649 = vperm.xlu0 %648, %v519
        %v650 = vpop.permute.xlu0 %649
        %653 = vset.pattern.permute.xlu0 0
        %654 = vperm.xlu0 %653, %v520
        %v655 = vpop.permute.xlu0 %654
        %658 = vset.pattern.permute.xlu0 0
        %659 = vperm.xlu0 %658, %v521
        %v660 = vpop.permute.xlu0 %659
        %663 = vset.pattern.permute.xlu0 0
        %664 = vperm.xlu0 %663, %v522
        %v665 = vpop.permute.xlu0 %664
        %668 = vset.pattern.permute.xlu0 0
        %669 = vperm.xlu0 %668, %v523
        %v670 = vpop.permute.xlu0 %669
        %673 = vset.pattern.permute.xlu0 0
        %674 = vperm.xlu0 %673, %v524
        %v675 = vpop.permute.xlu0 %674
        %678 = vset.pattern.permute.xlu0 0
        %679 = vperm.xlu0 %678, %v525
        %v680 = vpop.permute.xlu0 %679
        %683 = vset.pattern.permute.xlu0 0
        %684 = vperm.xlu0 %683, %v526
        %v685 = vpop.permute.xlu0 %684
        %v719 = vunpack.c.l.b16 %v463
        %v720 = vunpack.c.l.b16 %v464
        %v721 = vunpack.c.l.b16 %v465
        %v722 = vunpack.c.l.b16 %v466
        %v723 = vunpack.c.l.b16 %v467
        %v724 = vunpack.c.l.b16 %v468
        %v725 = vunpack.c.l.b16 %v469
        %v726 = vunpack.c.l.b16 %v470
        %v727 = vunpack.c.l.b16 %v471
        %v728 = vunpack.c.l.b16 %v472
        %v729 = vunpack.c.l.b16 %v473
        %v730 = vunpack.c.l.b16 %v474
        %v731 = vunpack.c.l.b16 %v475
        %v732 = vunpack.c.l.b16 %v476
        %v733 = vunpack.c.l.b16 %v477
        %v734 = vunpack.c.l.b16 %v478
        %v735 = vunpack.c.l.b16 %v479
        %v736 = vunpack.c.l.b16 %v480
        %v737 = vunpack.c.l.b16 %v481
        %v738 = vunpack.c.l.b16 %v482
        %v739 = vunpack.c.l.b16 %v483
        %v740 = vunpack.c.l.b16 %v484
        %v741 = vunpack.c.l.b16 %v485
        %v742 = vunpack.c.l.b16 %v486
        %v743 = vunpack.c.l.b16 %v487
        %v744 = vunpack.c.l.b16 %v488
        %v745 = vunpack.c.l.b16 %v489
        %v746 = vunpack.c.l.b16 %v490
        %v747 = vunpack.c.l.b16 %v491
        %v748 = vunpack.c.l.b16 %v492
        %v749 = vunpack.c.l.b16 %v493
        %v750 = vunpack.c.l.b16 %v494
        %v751 = vpack.c.b16 %v720, %v719
        %v752 = vpack.c.b16 %v722, %v721
        %v753 = vpack.c.b16 %v724, %v723
        %v754 = vpack.c.b16 %v726, %v725
        %v755 = vpack.c.b16 %v728, %v727
        %v756 = vpack.c.b16 %v730, %v729
        %v757 = vpack.c.b16 %v732, %v731
        %v758 = vpack.c.b16 %v734, %v733
        %v759 = vpack.c.b16 %v736, %v735
        %v760 = vpack.c.b16 %v738, %v737
        %v761 = vpack.c.b16 %v740, %v739
        %v762 = vpack.c.b16 %v742, %v741
        %v763 = vpack.c.b16 %v744, %v743
        %v764 = vpack.c.b16 %v746, %v745
        %v765 = vpack.c.b16 %v748, %v747
        %v766 = vpack.c.b16 %v750, %v749
        %vm767 = vcmask 31744
        %v769 = vsel %vm767, %v751, 0
        %v772 = vsel %vm767, %v752, 0
        %v775 = vsel %vm767, %v753, 0
        %v778 = vsel %vm767, %v754, 0
        %v781 = vsel %vm767, %v755, 0
        %v784 = vsel %vm767, %v756, 0
        %v787 = vsel %vm767, %v757, 0
        %v790 = vsel %vm767, %v758, 0
        %v793 = vsel %vm767, %v759, 0
        %v796 = vsel %vm767, %v760, 0
        %v799 = vsel %vm767, %v761, 0
        %v802 = vsel %vm767, %v762, 0
        %v805 = vsel %vm767, %v763, 0
        %v808 = vsel %vm767, %v764, 0
        %v811 = vsel %vm767, %v765, 0
        %v814 = vsel %vm767, %v766, 0
        %vm816 = vcmask 1041408
        %v818 = vsel %vm816, %v462, 0
        %820 = vmatprep.subr.bf16.mxu0 0
        %821 = vmatpush1.bf16.msra.mxu0 %v818
        %822 = vmatprep.subr.bf16.mxu0 0
        %823 = vmatpush1.bf16.msra.mxu0 0
        %824 = vmatprep.subr.bf16.mxu0 0
        %825 = vmatpush1.bf16.msra.mxu0 0
        %826 = vmatprep.subr.bf16.mxu0 0
        %827 = vmatpush1.bf16.msra.mxu0 0
        %828 = vmatprep.subr.bf16.mxu0 0
        %829 = vmatpush1.bf16.msra.mxu0 0
        %830 = vmatprep.subr.bf16.mxu0 0
        %831 = vmatpush1.bf16.msra.mxu0 0
        %832 = vmatprep.subr.bf16.mxu0 0
        %833 = vmatpush1.bf16.msra.mxu0 0
        %834 = vmatprep.subr.bf16.mxu0 0
        %835 = vmatpush1.bf16.msra.mxu0 0
        %836 = vmatprep.subr.bf16.mxu0 0
        %837 = vmatpush1.bf16.msra.mxu0 0
        %838 = vmatprep.subr.bf16.mxu0 0
        %839 = vmatpush1.bf16.msra.mxu0 0
        %840 = vmatprep.subr.bf16.mxu0 0
        %841 = vmatpush1.bf16.msra.mxu0 0
        %842 = vmatprep.subr.bf16.mxu0 0
        %843 = vmatpush1.bf16.msra.mxu0 0
        %844 = vmatprep.subr.bf16.mxu0 0
        %845 = vmatpush1.bf16.msra.mxu0 0
        %846 = vmatprep.subr.bf16.mxu0 0
        %847 = vmatpush1.bf16.msra.mxu0 0
        %848 = vmatprep.subr.bf16.mxu0 0
        %849 = vmatpush1.bf16.msra.mxu0 0
        %850 = vmatprep.subr.bf16.mxu0 0
        %851 = vmatpush1.bf16.msra.mxu0 0
        %852 = vmatprep.mubr.bf16.mxu0 0
        %853 = vmatmul.mubr.bf16.gmra.mrb[0].mxu0 %v769
        %v854 = vpop.f32.mrb[0].mxu0
        %v855 = vadd.f32 %v530, %v854
        %v856 = vpop.f32.mrb[0].mxu0
        %v857 = vpop.f32.mrb[0].mxu0
        %v858 = vadd.f32 %v535, %v857
        %v859 = vpop.f32.mrb[0].mxu0
        %860 = vmatprep.mubr.bf16.mxu0 0
        %861 = vmatmul.mubr.bf16.gmra.mrb[0].mxu0 %v772
        %v862 = vpop.f32.mrb[0].mxu0
        %v863 = vadd.f32 %v540, %v862
        %v864 = vpop.f32.mrb[0].mxu0
        %v865 = vpop.f32.mrb[0].mxu0
        %v866 = vadd.f32 %v545, %v865
        %v867 = vpop.f32.mrb[0].mxu0
        %868 = vmatprep.mubr.bf16.mxu0 0
        %869 = vmatmul.mubr.bf16.gmra.mrb[0].mxu0 %v775
        %v870 = vpop.f32.mrb[0].mxu0
        %v871 = vadd.f32 %v550, %v870
        %v872 = vpop.f32.mrb[0].mxu0
        %v873 = vpop.f32.mrb[0].mxu0
        %v874 = vadd.f32 %v555, %v873
        %v875 = vpop.f32.mrb[0].mxu0
        %876 = vmatprep.mubr.bf16.mxu0 0
        %877 = vmatmul.mubr.bf16.gmra.mrb[0].mxu0 %v778
        %v878 = vpop.f32.mrb[0].mxu0
        %v879 = vadd.f32 %v560, %v878
        %v880 = vpop.f32.mrb[0].mxu0
        %v881 = vpop.f32.mrb[0].mxu0
        %v882 = vadd.f32 %v565, %v881
        %v883 = vpop.f32.mrb[0].mxu0
        %884 = vmatprep.mubr.bf16.mxu0 0
        %885 = vmatmul.mubr.bf16.gmra.mrb[0].mxu0 %v781
        %v886 = vpop.f32.mrb[0].mxu0
        %v887 = vadd.f32 %v570, %v886
        %v888 = vpop.f32.mrb[0].mxu0
        %v889 = vpop.f32.mrb[0].mxu0
        %v890 = vadd.f32 %v575, %v889
        %v891 = vpop.f32.mrb[0].mxu0
        %892 = vmatprep.mubr.bf16.mxu0 0
        %893 = vmatmul.mubr.bf16.gmra.mrb[0].mxu0 %v784
        %v894 = vpop.f32.mrb[0].mxu0
        %v895 = vadd.f32 %v580, %v894
        %v896 = vpop.f32.mrb[0].mxu0
        %v897 = vpop.f32.mrb[0].mxu0
        %v898 = vadd.f32 %v585, %v897
        %v899 = vpop.f32.mrb[0].mxu0
        %900 = vmatprep.mubr.bf16.mxu0 0
        %901 = vmatmul.mubr.bf16.gmra.mrb[0].mxu0 %v787
        %v902 = vpop.f32.mrb[0].mxu0
        %v903 = vadd.f32 %v590, %v902
        %v904 = vpop.f32.mrb[0].mxu0
        %v905 = vpop.f32.mrb[0].mxu0
        %v906 = vadd.f32 %v595, %v905
        %v907 = vpop.f32.mrb[0].mxu0
        %908 = vmatprep.mubr.bf16.mxu0 0
        %909 = vmatmul.mubr.bf16.gmra.mrb[0].mxu0 %v790
        %v910 = vpop.f32.mrb[0].mxu0
        %v911 = vadd.f32 %v600, %v910
        %v912 = vpop.f32.mrb[0].mxu0
        %v913 = vpop.f32.mrb[0].mxu0
        %v914 = vadd.f32 %v605, %v913
        %v915 = vpop.f32.mrb[0].mxu0
        %916 = vmatprep.mubr.bf16.mxu0 0
        %917 = vmatmul.mubr.bf16.gmra.mrb[0].mxu0 %v793
        %v918 = vpop.f32.mrb[0].mxu0
        %v919 = vadd.f32 %v610, %v918
        %v920 = vpop.f32.mrb[0].mxu0
        %v921 = vpop.f32.mrb[0].mxu0
        %v922 = vadd.f32 %v615, %v921
        %v923 = vpop.f32.mrb[0].mxu0
        %924 = vmatprep.mubr.bf16.mxu0 0
        %925 = vmatmul.mubr.bf16.gmra.mrb[0].mxu0 %v796
        %v926 = vpop.f32.mrb[0].mxu0
        %v927 = vadd.f32 %v620, %v926
        %v928 = vpop.f32.mrb[0].mxu0
        %v929 = vpop.f32.mrb[0].mxu0
        %v930 = vadd.f32 %v625, %v929
        %v931 = vpop.f32.mrb[0].mxu0
        %932 = vmatprep.mubr.bf16.mxu0 0
        %933 = vmatmul.mubr.bf16.gmra.mrb[0].mxu0 %v799
        %v934 = vpop.f32.mrb[0].mxu0
        %v935 = vadd.f32 %v630, %v934
        %v936 = vpop.f32.mrb[0].mxu0
        %v937 = vpop.f32.mrb[0].mxu0
        %v938 = vadd.f32 %v635, %v937
        %v939 = vpop.f32.mrb[0].mxu0
        %940 = vmatprep.mubr.bf16.mxu0 0
        %941 = vmatmul.mubr.bf16.gmra.mrb[0].mxu0 %v802
        %v942 = vpop.f32.mrb[0].mxu0
        %v943 = vadd.f32 %v640, %v942
        %v944 = vpop.f32.mrb[0].mxu0
        %v945 = vpop.f32.mrb[0].mxu0
        %v946 = vadd.f32 %v645, %v945
        %v947 = vpop.f32.mrb[0].mxu0
        %948 = vmatprep.mubr.bf16.mxu0 0
        %949 = vmatmul.mubr.bf16.gmra.mrb[0].mxu0 %v805
        %v950 = vpop.f32.mrb[0].mxu0
        %v951 = vadd.f32 %v650, %v950
        %v952 = vpop.f32.mrb[0].mxu0
        %v953 = vpop.f32.mrb[0].mxu0
        %v954 = vadd.f32 %v655, %v953
        %v955 = vpop.f32.mrb[0].mxu0
        %956 = vmatprep.mubr.bf16.mxu0 0
        %957 = vmatmul.mubr.bf16.gmra.mrb[0].mxu0 %v808
        %v958 = vpop.f32.mrb[0].mxu0
        %v959 = vadd.f32 %v660, %v958
        %v960 = vpop.f32.mrb[0].mxu0
        %v961 = vpop.f32.mrb[0].mxu0
        %v962 = vadd.f32 %v665, %v961
        %v963 = vpop.f32.mrb[0].mxu0
        %964 = vmatprep.mubr.bf16.mxu0 0
        %965 = vmatmul.mubr.bf16.gmra.mrb[0].mxu0 %v811
        %v966 = vpop.f32.mrb[0].mxu0
        %v967 = vadd.f32 %v670, %v966
        %v968 = vpop.f32.mrb[0].mxu0
        %v969 = vpop.f32.mrb[0].mxu0
        %v970 = vadd.f32 %v675, %v969
        %v971 = vpop.f32.mrb[0].mxu0
        %972 = vmatprep.mubr.bf16.mxu0 0
        %973 = vmatmul.mubr.bf16.gmra.mrb[0].mxu0 %v814
        %v974 = vpop.f32.mrb[0].mxu0
        %v975 = vadd.f32 %v680, %v974
        %v976 = vpop.f32.mrb[0].mxu0
        %v977 = vpop.f32.mrb[0].mxu0
        %v978 = vadd.f32 %v685, %v977
        %v979 = vpop.f32.mrb[0].mxu0
        %980 = vdwg.mxu0
        %v981 = vmax.f32 %v855, 0.0
        %v982 = vmax.f32 %v858, 0.0
        %v983 = vmax.f32 %v863, 0.0
        %v984 = vmax.f32 %v866, 0.0
        %v985 = vmax.f32 %v871, 0.0
        %v986 = vmax.f32 %v874, 0.0
        %v987 = vmax.f32 %v879, 0.0
        %v988 = vmax.f32 %v882, 0.0
        %v989 = vmax.f32 %v887, 0.0
        %v990 = vmax.f32 %v890, 0.0
        %v991 = vmax.f32 %v895, 0.0
        %v992 = vmax.f32 %v898, 0.0
        %v993 = vmax.f32 %v903, 0.0
        %v994 = vmax.f32 %v906, 0.0
        %v995 = vmax.f32 %v911, 0.0
        %v996 = vmax.f32 %v914, 0.0
        %v997 = vmax.f32 %v919, 0.0
        %v998 = vmax.f32 %v922, 0.0
        %v999 = vmax.f32 %v927, 0.0
        %v1000 = vmax.f32 %v930, 0.0
        %v1001 = vmax.f32 %v935, 0.0
        %v1002 = vmax.f32 %v938, 0.0
        %v1003 = vmax.f32 %v943, 0.0
        %v1004 = vmax.f32 %v946, 0.0
        %v1005 = vmax.f32 %v951, 0.0
        %v1006 = vmax.f32 %v954, 0.0
        %v1007 = vmax.f32 %v959, 0.0
        %v1008 = vmax.f32 %v962, 0.0
        %v1009 = vmax.f32 %v967, 0.0
        %v1010 = vmax.f32 %v970, 0.0
        %v1011 = vmax.f32 %v975, 0.0
        %v1012 = vmax.f32 %v978, 0.0
        %v1013 = vld [vmem:[%s4] sm:$0xff]
        %v1014 = vld [vmem:[%s4 + $0x8] sm:$0xff]
        %v1015 = vld [vmem:[%s4 + $0x10] sm:$0xff]
        %v1016 = vld [vmem:[%s4 + $0x18] sm:$0xff]
        %v1017 = vld [vmem:[%s4 + $0x20] sm:$0xff]
        %v1018 = vld [vmem:[%s4 + $0x28] sm:$0xff]
        %v1019 = vld [vmem:[%s4 + $0x30] sm:$0xff]
        %v1020 = vld [vmem:[%s4 + $0x38] sm:$0xff]
        %v1021 = vld [vmem:[%s4 + $0x40] sm:$0xff]
        %v1022 = vld [vmem:[%s4 + $0x48] sm:$0xff]
        %v1023 = vld [vmem:[%s4 + $0x50] sm:$0xff]
        %v1024 = vld [vmem:[%s4 + $0x58] sm:$0xff]
        %v1025 = vld [vmem:[%s4 + $0x60] sm:$0xff]
        %v1026 = vld [vmem:[%s4 + $0x68] sm:$0xff]
        %v1027 = vld [vmem:[%s4 + $0x70] sm:$0xff]
        %v1028 = vld [vmem:[%s4 + $0x78] sm:$0xff]
        %v1029 = vld [vmem:[%s4 + $0x80] sm:$0xff]
        %v1030 = vld [vmem:[%s4 + $0x88] sm:$0xff]
        %v1031 = vld [vmem:[%s4 + $0x90] sm:$0xff]
        %v1032 = vld [vmem:[%s4 + $0x98] sm:$0xff]
        %v1033 = vld [vmem:[%s4 + $0xa0] sm:$0xff]
        %v1034 = vld [vmem:[%s4 + $0xa8] sm:$0xff]
        %v1035 = vld [vmem:[%s4 + $0xb0] sm:$0xff]
        %v1036 = vld [vmem:[%s4 + $0xb8] sm:$0xff]
        %v1037 = vld [vmem:[%s4 + $0xc0] sm:$0xff]
        %v1038 = vld [vmem:[%s4 + $0xc8] sm:$0xff]
        %v1039 = vld [vmem:[%s4 + $0xd0] sm:$0xff]
        %v1040 = vld [vmem:[%s4 + $0xd8] sm:$0xff]
        %v1041 = vld [vmem:[%s4 + $0xe0] sm:$0xff]
        %v1042 = vld [vmem:[%s4 + $0xe8] sm:$0xff]
        %v1043 = vld [vmem:[%s4 + $0xf0] sm:$0xff]
        %v1044 = vld [vmem:[%s4 + $0xf8] sm:$0xff]
        %v1045 = vpack.c.bf16 %v982, %v981
        %v1046 = vpack.c.bf16 %v984, %v983
        %v1047 = vpack.c.bf16 %v986, %v985
        %v1048 = vpack.c.bf16 %v988, %v987
        %v1049 = vpack.c.bf16 %v990, %v989
        %v1050 = vpack.c.bf16 %v992, %v991
        %v1051 = vpack.c.bf16 %v994, %v993
        %v1052 = vpack.c.bf16 %v996, %v995
        %v1053 = vpack.c.bf16 %v998, %v997
        %v1054 = vpack.c.bf16 %v1000, %v999
        %v1055 = vpack.c.bf16 %v1002, %v1001
        %v1056 = vpack.c.bf16 %v1004, %v1003
        %v1057 = vpack.c.bf16 %v1006, %v1005
        %v1058 = vpack.c.bf16 %v1008, %v1007
        %v1059 = vpack.c.bf16 %v1010, %v1009
        %v1060 = vpack.c.bf16 %v1012, %v1011
        %v1061 = vld [vmem:[%s5] sm:$0xff]
        %v1062 = vld [vmem:[%s5 + $0x8] sm:$0xff]
        %v1063 = vld [vmem:[%s5 + $0x10] sm:$0xff]
        %v1064 = vld [vmem:[%s5 + $0x18] sm:$0xff]
        %v1065 = vld [vmem:[%s5 + $0x20] sm:$0xff]
        %v1066 = vld [vmem:[%s5 + $0x28] sm:$0xff]
        %v1067 = vld [vmem:[%s5 + $0x30] sm:$0xff]
        %v1068 = vld [vmem:[%s5 + $0x38] sm:$0xff]
        %v1069 = vld [vmem:[%s5 + $0x40] sm:$0xff]
        %v1070 = vld [vmem:[%s5 + $0x48] sm:$0xff]
        %v1071 = vld [vmem:[%s5 + $0x50] sm:$0xff]
        %v1072 = vld [vmem:[%s5 + $0x58] sm:$0xff]
        %v1073 = vld [vmem:[%s5 + $0x60] sm:$0xff]
        %v1074 = vld [vmem:[%s5 + $0x68] sm:$0xff]
        %v1075 = vld [vmem:[%s5 + $0x70] sm:$0xff]
        %v1076 = vld [vmem:[%s5 + $0x78] sm:$0xff]
        %v1077 = vld [vmem:[%s5 + $0x80] sm:$0xff]
        %v1078 = vld [vmem:[%s5 + $0x88] sm:$0xff]
        %v1079 = vld [vmem:[%s5 + $0x90] sm:$0xff]
        %v1080 = vld [vmem:[%s5 + $0x98] sm:$0xff]
        %v1081 = vld [vmem:[%s5 + $0xa0] sm:$0xff]
        %v1082 = vld [vmem:[%s5 + $0xa8] sm:$0xff]
        %v1083 = vld [vmem:[%s5 + $0xb0] sm:$0xff]
        %v1084 = vld [vmem:[%s5 + $0xb8] sm:$0xff]
        %v1085 = vld [vmem:[%s5 + $0xc0] sm:$0xff]
        %v1086 = vld [vmem:[%s5 + $0xc8] sm:$0xff]
        %v1087 = vld [vmem:[%s5 + $0xd0] sm:$0xff]
        %v1088 = vld [vmem:[%s5 + $0xd8] sm:$0xff]
        %v1089 = vld [vmem:[%s5 + $0xe0] sm:$0xff]
        %v1090 = vld [vmem:[%s5 + $0xe8] sm:$0xff]
        %v1091 = vld [vmem:[%s5 + $0xf0] sm:$0xff]
        %v1092 = vld [vmem:[%s5 + $0xf8] sm:$0xff]
        %1094 = vset.pattern.permute.xlu0 0
        %1095 = vperm.xlu0 %1094, %v1061
        %v1096 = vpop.permute.xlu0 %1095
        %1099 = vset.pattern.permute.xlu0 0
        %1100 = vperm.xlu0 %1099, %v1062
        %v1101 = vpop.permute.xlu0 %1100
        %1104 = vset.pattern.permute.xlu0 0
        %1105 = vperm.xlu0 %1104, %v1063
        %v1106 = vpop.permute.xlu0 %1105
        %1109 = vset.pattern.permute.xlu0 0
        %1110 = vperm.xlu0 %1109, %v1064
        %v1111 = vpop.permute.xlu0 %1110
        %1114 = vset.pattern.permute.xlu0 0
        %1115 = vperm.xlu0 %1114, %v1065
        %v1116 = vpop.permute.xlu0 %1115
        %1119 = vset.pattern.permute.xlu0 0
        %1120 = vperm.xlu0 %1119, %v1066
        %v1121 = vpop.permute.xlu0 %1120
        %1124 = vset.pattern.permute.xlu0 0
        %1125 = vperm.xlu0 %1124, %v1067
        %v1126 = vpop.permute.xlu0 %1125
        %1129 = vset.pattern.permute.xlu0 0
        %1130 = vperm.xlu0 %1129, %v1068
        %v1131 = vpop.permute.xlu0 %1130
        %1134 = vset.pattern.permute.xlu0 0
        %1135 = vperm.xlu0 %1134, %v1069
        %v1136 = vpop.permute.xlu0 %1135
        %1139 = vset.pattern.permute.xlu0 0
        %1140 = vperm.xlu0 %1139, %v1070
        %v1141 = vpop.permute.xlu0 %1140
        %1144 = vset.pattern.permute.xlu0 0
        %1145 = vperm.xlu0 %1144, %v1071
        %v1146 = vpop.permute.xlu0 %1145
        %1149 = vset.pattern.permute.xlu0 0
        %1150 = vperm.xlu0 %1149, %v1072
        %v1151 = vpop.permute.xlu0 %1150
        %1154 = vset.pattern.permute.xlu0 0
        %1155 = vperm.xlu0 %1154, %v1073
        %v1156 = vpop.permute.xlu0 %1155
        %1159 = vset.pattern.permute.xlu0 0
        %1160 = vperm.xlu0 %1159, %v1074
        %v1161 = vpop.permute.xlu0 %1160
        %1164 = vset.pattern.permute.xlu0 0
        %1165 = vperm.xlu0 %1164, %v1075
        %v1166 = vpop.permute.xlu0 %1165
        %1169 = vset.pattern.permute.xlu0 0
        %1170 = vperm.xlu0 %1169, %v1076
        %v1171 = vpop.permute.xlu0 %1170
        %1174 = vset.pattern.permute.xlu0 0
        %1175 = vperm.xlu0 %1174, %v1077
        %v1176 = vpop.permute.xlu0 %1175
        %1179 = vset.pattern.permute.xlu0 0
        %1180 = vperm.xlu0 %1179, %v1078
        %v1181 = vpop.permute.xlu0 %1180
        %1184 = vset.pattern.permute.xlu0 0
        %1185 = vperm.xlu0 %1184, %v1079
        %v1186 = vpop.permute.xlu0 %1185
        %1189 = vset.pattern.permute.xlu0 0
        %1190 = vperm.xlu0 %1189, %v1080
        %v1191 = vpop.permute.xlu0 %1190
        %1194 = vset.pattern.permute.xlu0 0
        %1195 = vperm.xlu0 %1194, %v1081
        %v1196 = vpop.permute.xlu0 %1195
        %1199 = vset.pattern.permute.xlu0 0
        %1200 = vperm.xlu0 %1199, %v1082
        %v1201 = vpop.permute.xlu0 %1200
        %1204 = vset.pattern.permute.xlu0 0
        %1205 = vperm.xlu0 %1204, %v1083
        %v1206 = vpop.permute.xlu0 %1205
        %1209 = vset.pattern.permute.xlu0 0
        %1210 = vperm.xlu0 %1209, %v1084
        %v1211 = vpop.permute.xlu0 %1210
        %1214 = vset.pattern.permute.xlu0 0
        %1215 = vperm.xlu0 %1214, %v1085
        %v1216 = vpop.permute.xlu0 %1215
        %1219 = vset.pattern.permute.xlu0 0
        %1220 = vperm.xlu0 %1219, %v1086
        %v1221 = vpop.permute.xlu0 %1220
        %1224 = vset.pattern.permute.xlu0 0
        %1225 = vperm.xlu0 %1224, %v1087
        %v1226 = vpop.permute.xlu0 %1225
        %1229 = vset.pattern.permute.xlu0 0
        %1230 = vperm.xlu0 %1229, %v1088
        %v1231 = vpop.permute.xlu0 %1230
        %1234 = vset.pattern.permute.xlu0 0
        %1235 = vperm.xlu0 %1234, %v1089
        %v1236 = vpop.permute.xlu0 %1235
        %1239 = vset.pattern.permute.xlu0 0
        %1240 = vperm.xlu0 %1239, %v1090
        %v1241 = vpop.permute.xlu0 %1240
        %1244 = vset.pattern.permute.xlu0 0
        %1245 = vperm.xlu0 %1244, %v1091
        %v1246 = vpop.permute.xlu0 %1245
        %1249 = vset.pattern.permute.xlu0 0
        %1250 = vperm.xlu0 %1249, %v1092
        %v1251 = vpop.permute.xlu0 %1250
        %v1285 = vunpack.c.l.b16 %v1013
        %v1286 = vunpack.c.h.b16 %v1013
        %v1287 = vunpack.c.l.b16 %v1014
        %v1288 = vunpack.c.h.b16 %v1014
        %v1289 = vunpack.c.l.b16 %v1015
        %v1290 = vunpack.c.h.b16 %v1015
        %v1291 = vunpack.c.l.b16 %v1016
        %v1292 = vunpack.c.h.b16 %v1016
        %v1293 = vunpack.c.l.b16 %v1017
        %v1294 = vunpack.c.h.b16 %v1017
        %v1295 = vunpack.c.l.b16 %v1018
        %v1296 = vunpack.c.h.b16 %v1018
        %v1297 = vunpack.c.l.b16 %v1019
        %v1298 = vunpack.c.h.b16 %v1019
        %v1299 = vunpack.c.l.b16 %v1020
        %v1300 = vunpack.c.h.b16 %v1020
        %v1301 = vunpack.c.l.b16 %v1021
        %v1302 = vunpack.c.h.b16 %v1021
        %v1303 = vunpack.c.l.b16 %v1022
        %v1304 = vunpack.c.h.b16 %v1022
        %v1305 = vunpack.c.l.b16 %v1023
        %v1306 = vunpack.c.h.b16 %v1023
        %v1307 = vunpack.c.l.b16 %v1024
        %v1308 = vunpack.c.h.b16 %v1024
        %v1309 = vunpack.c.l.b16 %v1025
        %v1310 = vunpack.c.h.b16 %v1025
        %v1311 = vunpack.c.l.b16 %v1026
        %v1312 = vunpack.c.h.b16 %v1026
        %v1313 = vunpack.c.l.b16 %v1027
        %v1314 = vunpack.c.h.b16 %v1027
        %v1315 = vunpack.c.l.b16 %v1028
        %v1316 = vunpack.c.h.b16 %v1028
        %v1317 = vunpack.c.l.b16 %v1029
        %v1318 = vunpack.c.h.b16 %v1029
        %v1319 = vunpack.c.l.b16 %v1030
        %v1320 = vunpack.c.h.b16 %v1030
        %v1321 = vunpack.c.l.b16 %v1031
        %v1322 = vunpack.c.h.b16 %v1031
        %v1323 = vunpack.c.l.b16 %v1032
        %v1324 = vunpack.c.h.b16 %v1032
        %v1325 = vunpack.c.l.b16 %v1033
        %v1326 = vunpack.c.h.b16 %v1033
        %v1327 = vunpack.c.l.b16 %v1034
        %v1328 = vunpack.c.h.b16 %v1034
        %v1329 = vunpack.c.l.b16 %v1035
        %v1330 = vunpack.c.h.b16 %v1035
        %v1331 = vunpack.c.l.b16 %v1036
        %v1332 = vunpack.c.h.b16 %v1036
        %v1333 = vunpack.c.l.b16 %v1037
        %v1334 = vunpack.c.h.b16 %v1037
        %v1335 = vunpack.c.l.b16 %v1038
        %v1336 = vunpack.c.h.b16 %v1038
        %v1337 = vunpack.c.l.b16 %v1039
        %v1338 = vunpack.c.h.b16 %v1039
        %v1339 = vunpack.c.l.b16 %v1040
        %v1340 = vunpack.c.h.b16 %v1040
        %v1341 = vunpack.c.l.b16 %v1041
        %v1342 = vunpack.c.h.b16 %v1041
        %v1343 = vunpack.c.l.b16 %v1042
        %v1344 = vunpack.c.h.b16 %v1042
        %v1345 = vunpack.c.l.b16 %v1043
        %v1346 = vunpack.c.h.b16 %v1043
        %v1347 = vunpack.c.l.b16 %v1044
        %v1348 = vunpack.c.h.b16 %v1044
        %v1349 = vpack.c.b16 %v1287, %v1285
        %v1350 = vpack.c.b16 %v1288, %v1286
        %v1351 = vpack.c.b16 %v1291, %v1289
        %v1352 = vpack.c.b16 %v1292, %v1290
        %v1353 = vpack.c.b16 %v1295, %v1293
        %v1354 = vpack.c.b16 %v1296, %v1294
        %v1355 = vpack.c.b16 %v1299, %v1297
        %v1356 = vpack.c.b16 %v1300, %v1298
        %v1357 = vpack.c.b16 %v1303, %v1301
        %v1358 = vpack.c.b16 %v1304, %v1302
        %v1359 = vpack.c.b16 %v1307, %v1305
        %v1360 = vpack.c.b16 %v1308, %v1306
        %v1361 = vpack.c.b16 %v1311, %v1309
        %v1362 = vpack.c.b16 %v1312, %v1310
        %v1363 = vpack.c.b16 %v1315, %v1313
        %v1364 = vpack.c.b16 %v1316, %v1314
        %v1365 = vpack.c.b16 %v1319, %v1317
        %v1366 = vpack.c.b16 %v1320, %v1318
        %v1367 = vpack.c.b16 %v1323, %v1321
        %v1368 = vpack.c.b16 %v1324, %v1322
        %v1369 = vpack.c.b16 %v1327, %v1325
        %v1370 = vpack.c.b16 %v1328, %v1326
        %v1371 = vpack.c.b16 %v1331, %v1329
        %v1372 = vpack.c.b16 %v1332, %v1330
        %v1373 = vpack.c.b16 %v1335, %v1333
        %v1374 = vpack.c.b16 %v1336, %v1334
        %v1375 = vpack.c.b16 %v1339, %v1337
        %v1376 = vpack.c.b16 %v1340, %v1338
        %v1377 = vpack.c.b16 %v1343, %v1341
        %v1378 = vpack.c.b16 %v1344, %v1342
        %v1379 = vpack.c.b16 %v1347, %v1345
        %v1380 = vpack.c.b16 %v1348, %v1346
        %1413 = vmatprep.subr.bf16.mxu0 0
        %1414 = vmatpush1.bf16.msra.mxu0 %v1045
        %1415 = vmatprep.subr.bf16.mxu0 0
        %1416 = vmatpush1.bf16.msra.mxu0 %v1046
        %1417 = vmatprep.subr.bf16.mxu0 0
        %1418 = vmatpush1.bf16.msra.mxu0 %v1047
        %1419 = vmatprep.subr.bf16.mxu0 0
        %1420 = vmatpush1.bf16.msra.mxu0 %v1048
        %1421 = vmatprep.subr.bf16.mxu0 0
        %1422 = vmatpush1.bf16.msra.mxu0 %v1049
        %1423 = vmatprep.subr.bf16.mxu0 0
        %1424 = vmatpush1.bf16.msra.mxu0 %v1050
        %1425 = vmatprep.subr.bf16.mxu0 0
        %1426 = vmatpush1.bf16.msra.mxu0 %v1051
        %1427 = vmatprep.subr.bf16.mxu0 0
        %1428 = vmatpush1.bf16.msra.mxu0 %v1052
        %1429 = vmatprep.subr.bf16.mxu0 0
        %1430 = vmatpush1.bf16.msra.mxu0 %v1053
        %1431 = vmatprep.subr.bf16.mxu0 0
        %1432 = vmatpush1.bf16.msra.mxu0 %v1054
        %1433 = vmatprep.subr.bf16.mxu0 0
        %1434 = vmatpush1.bf16.msra.mxu0 %v1055
        %1435 = vmatprep.subr.bf16.mxu0 0
        %1436 = vmatpush1.bf16.msra.mxu0 %v1056
        %1437 = vmatprep.subr.bf16.mxu0 0
        %1438 = vmatpush1.bf16.msra.mxu0 %v1057
        %1439 = vmatprep.subr.bf16.mxu0 0
        %1440 = vmatpush1.bf16.msra.mxu0 %v1058
        %1441 = vmatprep.subr.bf16.mxu0 0
        %1442 = vmatpush1.bf16.msra.mxu0 %v1059
        %1443 = vmatprep.subr.bf16.mxu0 0
        %1444 = vmatpush1.bf16.msra.mxu0 %v1060
        %1445 = vmatprep.mubr.bf16.mxu0 %v1350
        %1446 = vmatmul.mubr.bf16.gmra.mrb[0].mxu0 %v1349
        %v1447 = vpop.f32.mrb[0].mxu0
        %v1448 = vadd.f32 %v1096, %v1447
        %v1449 = vpop.f32.mrb[0].mxu0
        %v1450 = vpop.f32.mrb[0].mxu0
        %v1451 = vadd.f32 %v1101, %v1450
        %v1452 = vpop.f32.mrb[0].mxu0
        %1453 = vmatprep.mubr.bf16.mxu0 %v1352
        %1454 = vmatmul.mubr.bf16.gmra.mrb[0].mxu0 %v1351
        %v1455 = vpop.f32.mrb[0].mxu0
        %v1456 = vadd.f32 %v1106, %v1455
        %v1457 = vpop.f32.mrb[0].mxu0
        %v1458 = vpop.f32.mrb[0].mxu0
        %v1459 = vadd.f32 %v1111, %v1458
        %v1460 = vpop.f32.mrb[0].mxu0
        %1461 = vmatprep.mubr.bf16.mxu0 %v1354
        %1462 = vmatmul.mubr.bf16.gmra.mrb[0].mxu0 %v1353
        %v1463 = vpop.f32.mrb[0].mxu0
        %v1464 = vadd.f32 %v1116, %v1463
        %v1465 = vpop.f32.mrb[0].mxu0
        %v1466 = vpop.f32.mrb[0].mxu0
        %v1467 = vadd.f32 %v1121, %v1466
        %v1468 = vpop.f32.mrb[0].mxu0
        %1469 = vmatprep.mubr.bf16.mxu0 %v1356
        %1470 = vmatmul.mubr.bf16.gmra.mrb[0].mxu0 %v1355
        %v1471 = vpop.f32.mrb[0].mxu0
        %v1472 = vadd.f32 %v1126, %v1471
        %v1473 = vpop.f32.mrb[0].mxu0
        %v1474 = vpop.f32.mrb[0].mxu0
        %v1475 = vadd.f32 %v1131, %v1474
        %v1476 = vpop.f32.mrb[0].mxu0
        %1477 = vmatprep.mubr.bf16.mxu0 %v1358
        %1478 = vmatmul.mubr.bf16.gmra.mrb[0].mxu0 %v1357
        %v1479 = vpop.f32.mrb[0].mxu0
        %v1480 = vadd.f32 %v1136, %v1479
        %v1481 = vpop.f32.mrb[0].mxu0
        %v1482 = vpop.f32.mrb[0].mxu0
        %v1483 = vadd.f32 %v1141, %v1482
        %v1484 = vpop.f32.mrb[0].mxu0
        %1485 = vmatprep.mubr.bf16.mxu0 %v1360
        %1486 = vmatmul.mubr.bf16.gmra.mrb[0].mxu0 %v1359
        %v1487 = vpop.f32.mrb[0].mxu0
        %v1488 = vadd.f32 %v1146, %v1487
        %v1489 = vpop.f32.mrb[0].mxu0
        %v1490 = vpop.f32.mrb[0].mxu0
        %v1491 = vadd.f32 %v1151, %v1490
        %v1492 = vpop.f32.mrb[0].mxu0
        %1493 = vmatprep.mubr.bf16.mxu0 %v1362
        %1494 = vmatmul.mubr.bf16.gmra.mrb[0].mxu0 %v1361
        %v1495 = vpop.f32.mrb[0].mxu0
        %v1496 = vadd.f32 %v1156, %v1495
        %v1497 = vpop.f32.mrb[0].mxu0
        %v1498 = vpop.f32.mrb[0].mxu0
        %v1499 = vadd.f32 %v1161, %v1498
        %v1500 = vpop.f32.mrb[0].mxu0
        %1501 = vmatprep.mubr.bf16.mxu0 %v1364
        %1502 = vmatmul.mubr.bf16.gmra.mrb[0].mxu0 %v1363
        %v1503 = vpop.f32.mrb[0].mxu0
        %v1504 = vadd.f32 %v1166, %v1503
        %v1505 = vpop.f32.mrb[0].mxu0
        %v1506 = vpop.f32.mrb[0].mxu0
        %v1507 = vadd.f32 %v1171, %v1506
        %v1508 = vpop.f32.mrb[0].mxu0
        %1509 = vmatprep.mubr.bf16.mxu0 %v1366
        %1510 = vmatmul.mubr.bf16.gmra.mrb[0].mxu0 %v1365
        %v1511 = vpop.f32.mrb[0].mxu0
        %v1512 = vadd.f32 %v1176, %v1511
        %v1513 = vpop.f32.mrb[0].mxu0
        %v1514 = vpop.f32.mrb[0].mxu0
        %v1515 = vadd.f32 %v1181, %v1514
        %v1516 = vpop.f32.mrb[0].mxu0
        %1517 = vmatprep.mubr.bf16.mxu0 %v1368
        %1518 = vmatmul.mubr.bf16.gmra.mrb[0].mxu0 %v1367
        %v1519 = vpop.f32.mrb[0].mxu0
        %v1520 = vadd.f32 %v1186, %v1519
        %v1521 = vpop.f32.mrb[0].mxu0
        %v1522 = vpop.f32.mrb[0].mxu0
        %v1523 = vadd.f32 %v1191, %v1522
        %v1524 = vpop.f32.mrb[0].mxu0
        %1525 = vmatprep.mubr.bf16.mxu0 %v1370
        %1526 = vmatmul.mubr.bf16.gmra.mrb[0].mxu0 %v1369
        %v1527 = vpop.f32.mrb[0].mxu0
        %v1528 = vadd.f32 %v1196, %v1527
        %v1529 = vpop.f32.mrb[0].mxu0
        %v1530 = vpop.f32.mrb[0].mxu0
        %v1531 = vadd.f32 %v1201, %v1530
        %v1532 = vpop.f32.mrb[0].mxu0
        %1533 = vmatprep.mubr.bf16.mxu0 %v1372
        %1534 = vmatmul.mubr.bf16.gmra.mrb[0].mxu0 %v1371
        %v1535 = vpop.f32.mrb[0].mxu0
        %v1536 = vadd.f32 %v1206, %v1535
        %v1537 = vpop.f32.mrb[0].mxu0
        %v1538 = vpop.f32.mrb[0].mxu0
        %v1539 = vadd.f32 %v1211, %v1538
        %v1540 = vpop.f32.mrb[0].mxu0
        %1541 = vmatprep.mubr.bf16.mxu0 %v1374
        %1542 = vmatmul.mubr.bf16.gmra.mrb[0].mxu0 %v1373
        %v1543 = vpop.f32.mrb[0].mxu0
        %v1544 = vadd.f32 %v1216, %v1543
        %v1545 = vpop.f32.mrb[0].mxu0
        %v1546 = vpop.f32.mrb[0].mxu0
        %v1547 = vadd.f32 %v1221, %v1546
        %v1548 = vpop.f32.mrb[0].mxu0
        %1549 = vmatprep.mubr.bf16.mxu0 %v1376
        %1550 = vmatmul.mubr.bf16.gmra.mrb[0].mxu0 %v1375
        %v1551 = vpop.f32.mrb[0].mxu0
        %v1552 = vadd.f32 %v1226, %v1551
        %v1553 = vpop.f32.mrb[0].mxu0
        %v1554 = vpop.f32.mrb[0].mxu0
        %v1555 = vadd.f32 %v1231, %v1554
        %v1556 = vpop.f32.mrb[0].mxu0
        %1557 = vmatprep.mubr.bf16.mxu0 %v1378
        %1558 = vmatmul.mubr.bf16.gmra.mrb[0].mxu0 %v1377
        %v1559 = vpop.f32.mrb[0].mxu0
        %v1560 = vadd.f32 %v1236, %v1559
        %v1561 = vpop.f32.mrb[0].mxu0
        %v1562 = vpop.f32.mrb[0].mxu0
        %v1563 = vadd.f32 %v1241, %v1562
        %v1564 = vpop.f32.mrb[0].mxu0
        %1565 = vmatprep.mubr.bf16.mxu0 %v1380
        %1566 = vmatmul.mubr.bf16.gmra.mrb[0].mxu0 %v1379
        %v1567 = vpop.f32.mrb[0].mxu0
        %v1568 = vadd.f32 %v1246, %v1567
        %v1569 = vpop.f32.mrb[0].mxu0
        %v1570 = vpop.f32.mrb[0].mxu0
        %v1571 = vadd.f32 %v1251, %v1570
        %v1572 = vpop.f32.mrb[0].mxu0
        %1573 = vdwg.mxu0
        %v1574 = vmax.f32 %v1448, 0.0
        %v1575 = vmax.f32 %v1451, 0.0
        %v1576 = vmax.f32 %v1456, 0.0
        %v1577 = vmax.f32 %v1459, 0.0
        %v1578 = vmax.f32 %v1464, 0.0
        %v1579 = vmax.f32 %v1467, 0.0
        %v1580 = vmax.f32 %v1472, 0.0
        %v1581 = vmax.f32 %v1475, 0.0
        %v1582 = vmax.f32 %v1480, 0.0
        %v1583 = vmax.f32 %v1483, 0.0
        %v1584 = vmax.f32 %v1488, 0.0
        %v1585 = vmax.f32 %v1491, 0.0
        %v1586 = vmax.f32 %v1496, 0.0
        %v1587 = vmax.f32 %v1499, 0.0
        %v1588 = vmax.f32 %v1504, 0.0
        %v1589 = vmax.f32 %v1507, 0.0
        %v1590 = vmax.f32 %v1512, 0.0
        %v1591 = vmax.f32 %v1515, 0.0
        %v1592 = vmax.f32 %v1520, 0.0
        %v1593 = vmax.f32 %v1523, 0.0
        %v1594 = vmax.f32 %v1528, 0.0
        %v1595 = vmax.f32 %v1531, 0.0
        %v1596 = vmax.f32 %v1536, 0.0
        %v1597 = vmax.f32 %v1539, 0.0
        %v1598 = vmax.f32 %v1544, 0.0
        %v1599 = vmax.f32 %v1547, 0.0
        %v1600 = vmax.f32 %v1552, 0.0
        %v1601 = vmax.f32 %v1555, 0.0
        %v1602 = vmax.f32 %v1560, 0.0
        %v1603 = vmax.f32 %v1563, 0.0
        %v1604 = vmax.f32 %v1568, 0.0
        %v1605 = vmax.f32 %v1571, 0.0
        %v1606 = vld [vmem:[%s6] sm:$0xff]
        %v1607 = vpack.c.bf16 %v1575, %v1574
        %v1608 = vpack.c.bf16 %v1577, %v1576
        %v1609 = vpack.c.bf16 %v1579, %v1578
        %v1610 = vpack.c.bf16 %v1581, %v1580
        %v1611 = vpack.c.bf16 %v1583, %v1582
        %v1612 = vpack.c.bf16 %v1585, %v1584
        %v1613 = vpack.c.bf16 %v1587, %v1586
        %v1614 = vpack.c.bf16 %v1589, %v1588
        %v1615 = vpack.c.bf16 %v1591, %v1590
        %v1616 = vpack.c.bf16 %v1593, %v1592
        %v1617 = vpack.c.bf16 %v1595, %v1594
        %v1618 = vpack.c.bf16 %v1597, %v1596
        %v1619 = vpack.c.bf16 %v1599, %v1598
        %v1620 = vpack.c.bf16 %v1601, %v1600
        %v1621 = vpack.c.bf16 %v1603, %v1602
        %v1622 = vpack.c.bf16 %v1605, %v1604
        %v1623 = vld [vmem:[%s7] sm:$0xff]
        %1625 = vset.pattern.permute.xlu0 0
        %1626 = vperm.xlu0 %1625, %v1623
        %v1627 = vpop.permute.xlu0 %1626
        %v1630 = vunpack.c.l.b16 %v1606
        %v1631 = vunpack.c.h.b16 %v1606
        %v1632 = vpack.c.b16 %v1630, %v1630
        %v1633 = vpack.c.b16 %v1631, %v1631
        %1636 = vmatprep.subr.bf16.mxu0 0
        %1637 = vmatpush1.bf16.msra.mxu0 %v1607
        %1638 = vmatprep.subr.bf16.mxu0 0
        %1639 = vmatpush1.bf16.msra.mxu0 %v1608
        %1640 = vmatprep.subr.bf16.mxu0 0
        %1641 = vmatpush1.bf16.msra.mxu0 %v1609
        %1642 = vmatprep.subr.bf16.mxu0 0
        %1643 = vmatpush1.bf16.msra.mxu0 %v1610
        %1644 = vmatprep.subr.bf16.mxu0 0
        %1645 = vmatpush1.bf16.msra.mxu0 %v1611
        %1646 = vmatprep.subr.bf16.mxu0 0
        %1647 = vmatpush1.bf16.msra.mxu0 %v1612
        %1648 = vmatprep.subr.bf16.mxu0 0
        %1649 = vmatpush1.bf16.msra.mxu0 %v1613
        %1650 = vmatprep.subr.bf16.mxu0 0
        %1651 = vmatpush1.bf16.msra.mxu0 %v1614
        %1652 = vmatprep.subr.bf16.mxu0 0
        %1653 = vmatpush1.bf16.msra.mxu0 %v1615
        %1654 = vmatprep.subr.bf16.mxu0 0
        %1655 = vmatpush1.bf16.msra.mxu0 %v1616
        %1656 = vmatprep.subr.bf16.mxu0 0
        %1657 = vmatpush1.bf16.msra.mxu0 %v1617
        %1658 = vmatprep.subr.bf16.mxu0 0
        %1659 = vmatpush1.bf16.msra.mxu0 %v1618
        %1660 = vmatprep.subr.bf16.mxu0 0
        %1661 = vmatpush1.bf16.msra.mxu0 %v1619
        %1662 = vmatprep.subr.bf16.mxu0 0
        %1663 = vmatpush1.bf16.msra.mxu0 %v1620
        %1664 = vmatprep.subr.bf16.mxu0 0
        %1665 = vmatpush1.bf16.msra.mxu0 %v1621
        %1666 = vmatprep.subr.bf16.mxu0 0
        %1667 = vmatpush1.bf16.msra.mxu0 %v1622
        %1668 = vmatprep.mubr.bf16.mxu0 %v1633
        %1669 = vmatmul.mubr.bf16.gmra.mrb[0].mxu0 %v1632
        %v1670 = vpop.f32.mrb[0].mxu0
        %v1671 = vadd.f32 %v1627, %v1670
        %v1672 = vpop.f32.mrb[0].mxu0
        %v1673 = vpop.f32.mrb[0].mxu0
        %v1674 = vpop.f32.mrb[0].mxu0
        %1675 = vdwg.mxu0
        %v1676 = vtanh.pop %v1671
        %v1677 = vadd.f32 %v1676, 1.0
        %v1678 = vmul.f32 %v1677, 0.5
        %v1679 = vmul.f32 %v1678, 22.0
        %v1680 = vadd.f32 %v1679, -20.0
        %v1681 = vmul.f32 %v1680, 1.442695
        %v1682 = vpow.pop %v1681
        %v1683 = vld [vmem:[%s459] sm:$0xf]
        %v1685 = vrot.slane %v1683, 4
        %v1687 = vmul.f32 %v1682, %v1685
        %v1689 = vrot.slane %v1687, 4
        %v1691 = vadd.f32 %v1671, %v1689
        %v1692 = vtanh.pop %v1691
        %v1693 = vmul.f32 %v1683, %v1683
        %v1694 = vmul.f32 %v1680, 2.0
        %v1696 = vrot.slane %v1694, 4
        %v1698 = vadd.f32 %v1693, %v1696
        %v1699 = vadd.f32 %v1698, 1.837877
        %v1700 = vmul.f32 %v1699, -0.5
        %v1701 = vmul.f32 %v1691, -2.0
        %v1702 = vmax.f32 %v1701, 0.0
        %v1703 = vand.u32 2147483647, %v1701
        %v1704 = vsub.f32 0.0, %v1703
        %v1705 = vmul.f32 %v1704, 1.442695
        %v1706 = vpow.pop %v1705
        %v1707 = vadd.f32 %v1706, 1.0
        %v1708 = vlog2.pop %v1707
        %v1709 = vmul.f32 %v1708, 0.6931472
        %v1710 = vmul.f32 -0.5, %v1706
        %v1711 = vadd.f32 %v1710, 1.0
        %v1712 = vmul.f32 %v1711, %v1706
        %v1713 = vand.u32 2147483647, %v1706
        %vm1714 = vcmp.lt.f32.partialorder %v1713, 0.0004427343
        %v1715 = vsel %vm1714, %v1712, %v1709
        %v1716 = vadd.f32 %v1702, %v1715
        %v1717 = vsub.f32 0.6931472, %v1691
        %v1718 = vsub.f32 %v1717, %v1716
        %v1719 = vmul.f32 %v1718, 2.0
        %v1720 = vsub.f32 %v1700, %v1719
        %vm1721 = vcmask 1043456
        %v1722 = vsel %vm1721, %v1720, 0.0
        %v1723 = vrot.slane %v1722, 4
        %v1724 = vadd.f32 %v1722, %v1723
        %v1725 = vrot.slane %v1724, 2
        %v1726 = vadd.f32 %v1724, %v1725
        %v1727 = vrot.slane %v1726, 1
        %v1728 = vadd.f32 %v1726, %v1727
        %1729 = vst [vmem:[%s424] sm:$0xf] %v1671
        %1730 = vst [vmem:[%s431] sm:$0xf] %v1676
        %1731 = vst [vmem:[%s438 - $0x4] sm:$0xf0] %v1680
        %1732 = vst [vmem:[%s445] sm:$0xf] %v1692
        %1733 = vst [vmem:[%s451] sm:$0x1] %v1728
        %s1734 = sand.u32 %s219, 1
        %s1735 = scalar_lea.sflag [#allocation3], %s1734
        %s1736 = sand.u32 %s219, 1
        %s1737 = smul.addr %s1736, 4
        %s1738 = scalar_lea.vmem [#allocation2], %s1737
        %s1739 = sand.u32 %s33, 1
        %s1740 = scalar_lea.sflag [#allocation5], %s1739
        %s1741 = sand.u32 %s245, 1
        %s1742 = smul.addr %s1741, 4
        %s1743 = scalar_lea.vmem [#allocation4], %s1742
        %s1744 = sand.u32 %s33, 1
        %s1745 = scalar_lea.sflag [#allocation5], %s1744
        %s1746 = sand.u32 %s271, 1
        %s1747 = smul.addr %s1746, 4
        %s1748 = scalar_lea.vmem [#allocation6], %s1747
        %s1749 = sand.u32 %s33, 1
        %s1750 = scalar_lea.sflag [#allocation8], %s1749
        %s1751 = sand.u32 %s297, 1
        %s1752 = smul.addr %s1751, 4
        %s1753 = scalar_lea.vmem [#allocation7], %s1752
        %s1754 = sand.u32 %s33, 1
        %s1755 = scalar_lea.sflag [#allocation8], %s1754
        %s1756 = sand.u32 %s323, 1
        %s1757 = scalar_lea.vmem [#allocation9], %s1756
        // Predicated region
        $region53: #{tpu_custom_call.1} parent=51 // pred_check
          %p1758 = pneg %p229
        $region54: #{tpu_custom_call.1} parent=51 // pred_check_branch
          %1760 = sbr.rel (%p1758) target = $region56
        $region55: #{tpu_custom_call.1} parent=51 // pred_region
          %s1762 = ssub.s32 64, 64
          %1763 = vsyncadd %s1735, %s1762
          %s1764 = smul.addr %s33, 64
          %s1765 = scalar_lea.hbm %s8, %s1764
          %s1767 = sshll.u32 %s1738, 4
          %s1768 = int_to_ptr.vmem [resolvable:$true] %s1767
          %1770 = dma.vmem_to_hbm [thread:$0]  %s1768, 64, %s1765, %s1735
        $region56: #{tpu_custom_call.1} parent=51 // pred_fallthru
          _
        // Predicated region
        $region57: #{tpu_custom_call.1} parent=51 // pred_check
          %p1771 = pneg %p255
        $region58: #{tpu_custom_call.1} parent=51 // pred_check_branch
          %1773 = sbr.rel (%p1771) target = $region60
        $region59: #{tpu_custom_call.1} parent=51 // pred_region
          %s1775 = ssub.s32 64, 64
          %1776 = vsyncadd %s1740, %s1775
          %s1777 = smul.addr %s33, 64
          %s1778 = scalar_lea.hbm %s9, %s1777
          %s1780 = sshll.u32 %s1743, 4
          %s1781 = int_to_ptr.vmem [resolvable:$true] %s1780
          %1783 = dma.vmem_to_hbm [thread:$0]  %s1781, 64, %s1778, %s1740
        $region60: #{tpu_custom_call.1} parent=51 // pred_fallthru
          _
        // Predicated region
        $region61: #{tpu_custom_call.1} parent=51 // pred_check
          %p1784 = pneg %p281
        $region62: #{tpu_custom_call.1} parent=51 // pred_check_branch
          %1786 = sbr.rel (%p1784) target = $region64
        $region63: #{tpu_custom_call.1} parent=51 // pred_region
          %s1788 = ssub.s32 64, 64
          %1789 = vsyncadd %s1745, %s1788
          %s1790 = smul.addr %s33, 64
          %s1791 = scalar_lea.hbm %s10, %s1790
          %s1793 = sshll.u32 %s1748, 4
          %s1794 = int_to_ptr.vmem [resolvable:$true] %s1793
          %1796 = dma.vmem_to_hbm [thread:$0]  %s1794, 64, %s1791, %s1745
        $region64: #{tpu_custom_call.1} parent=51 // pred_fallthru
          _
        // Predicated region
        $region65: #{tpu_custom_call.1} parent=51 // pred_check
          %p1797 = pneg %p307
        $region66: #{tpu_custom_call.1} parent=51 // pred_check_branch
          %1799 = sbr.rel (%p1797) target = $region68
        $region67: #{tpu_custom_call.1} parent=51 // pred_region
          %s1801 = ssub.s32 64, 64
          %1802 = vsyncadd %s1750, %s1801
          %s1803 = smul.addr %s33, 64
          %s1804 = scalar_lea.hbm %s11, %s1803
          %s1806 = sshll.u32 %s1753, 4
          %s1807 = int_to_ptr.vmem [resolvable:$true] %s1806
          %1809 = dma.vmem_to_hbm [thread:$0]  %s1807, 64, %s1804, %s1750
        $region68: #{tpu_custom_call.1} parent=51 // pred_fallthru
          _
        // Predicated region
        $region69: #{tpu_custom_call.1} parent=51 // pred_check
          %p1810 = pneg %p333
        $region70: #{tpu_custom_call.1} parent=51 // pred_check_branch
          %1812 = sbr.rel (%p1810) target = $region72
        $region71: #{tpu_custom_call.1} parent=51 // pred_region
          %s1814 = ssub.s32 16, 16
          %1815 = vsyncadd %s1755, %s1814
          %s1816 = smul.addr %s33, 16
          %s1817 = scalar_lea.hbm %s12, %s1816
          %s1819 = sshll.u32 %s1757, 4
          %s1820 = int_to_ptr.vmem [resolvable:$true] %s1819
          %1822 = dma.vmem_to_hbm [thread:$0]  %s1820, 16, %s1817, %s1755
        $region72: #{tpu_custom_call.1} parent=51 // pred_fallthru
          _
      $region52: #{tpu_custom_call.1} parent=5 // pred_fallthru
        _
      %p1823 = scmp.le.s32.totalorder 2, %s28
      // Predicated region
      $region73: #{tpu_custom_call.1} parent=5 // pred_check
        %p1824 = pneg %p1823
      $region74: #{tpu_custom_call.1} parent=5 // pred_check_branch
        %1826 = sbr.rel (%p1824) target = $region76
      $region75: #{tpu_custom_call.1} parent=5 // pred_region
        %s1827 = ssub.s32 %s28, 2
        // Predicated region
        $region77: #{tpu_custom_call.1} parent=75 // pred_check
          %p1828 = pneg %p235
        $region78: #{tpu_custom_call.1} parent=75 // pred_check_branch
          %1830 = sbr.rel (%p1828) target = $region80
        $region79: #{tpu_custom_call.1} parent=75 // pred_region
          %s1831 = sand.u32 %s220, 1
          %s1832 = scalar_lea.sflag [#allocation3], %s1831
          %s1833 = sand.u32 %s220, 1
          %s1834 = smul.addr %s1833, 4
          %s1835 = scalar_lea.vmem [#allocation2], %s1834
          %1836 = dma.done %s1832, 64
        $region80: #{tpu_custom_call.1} parent=75 // pred_fallthru
          _
        // Predicated region
        $region81: #{tpu_custom_call.1} parent=75 // pred_check
          %p1837 = pneg %p261
        $region82: #{tpu_custom_call.1} parent=75 // pred_check_branch
          %1839 = sbr.rel (%p1837) target = $region84
        $region83: #{tpu_custom_call.1} parent=75 // pred_region
          %s1840 = sand.u32 %s34, 1
          %s1841 = scalar_lea.sflag [#allocation5], %s1840
          %s1842 = sand.u32 %s246, 1
          %s1843 = smul.addr %s1842, 4
          %s1844 = scalar_lea.vmem [#allocation4], %s1843
          %1845 = dma.done %s1841, 64
        $region84: #{tpu_custom_call.1} parent=75 // pred_fallthru
          _
        // Predicated region
        $region85: #{tpu_custom_call.1} parent=75 // pred_check
          %p1846 = pneg %p287
        $region86: #{tpu_custom_call.1} parent=75 // pred_check_branch
          %1848 = sbr.rel (%p1846) target = $region88
        $region87: #{tpu_custom_call.1} parent=75 // pred_region
          %s1849 = sand.u32 %s34, 1
          %s1850 = scalar_lea.sflag [#allocation5], %s1849
          %s1851 = sand.u32 %s272, 1
          %s1852 = smul.addr %s1851, 4
          %s1853 = scalar_lea.vmem [#allocation6], %s1852
          %1854 = dma.done %s1850, 64
        $region88: #{tpu_custom_call.1} parent=75 // pred_fallthru
          _
        // Predicated region
        $region89: #{tpu_custom_call.1} parent=75 // pred_check
          %p1855 = pneg %p313
        $region90: #{tpu_custom_call.1} parent=75 // pred_check_branch
          %1857 = sbr.rel (%p1855) target = $region92
        $region91: #{tpu_custom_call.1} parent=75 // pred_region
          %s1858 = sand.u32 %s34, 1
          %s1859 = scalar_lea.sflag [#allocation8], %s1858
          %s1860 = sand.u32 %s298, 1
          %s1861 = smul.addr %s1860, 4
          %s1862 = scalar_lea.vmem [#allocation7], %s1861
          %1863 = dma.done %s1859, 64
        $region92: #{tpu_custom_call.1} parent=75 // pred_fallthru
          _
        // Predicated region
        $region93: #{tpu_custom_call.1} parent=75 // pred_check
          %p1864 = pneg %p339
        $region94: #{tpu_custom_call.1} parent=75 // pred_check_branch
          %1866 = sbr.rel (%p1864) target = $region96
        $region95: #{tpu_custom_call.1} parent=75 // pred_region
          %s1867 = sand.u32 %s34, 1
          %s1868 = scalar_lea.sflag [#allocation8], %s1867
          %s1869 = sand.u32 %s324, 1
          %s1870 = scalar_lea.vmem [#allocation9], %s1869
          %1871 = dma.done %s1868, 16
        $region96: #{tpu_custom_call.1} parent=75 // pred_fallthru
          _
      $region76: #{tpu_custom_call.1} parent=5 // pred_fallthru
        _
    $region6: #{tpu_custom_call.1} parent=1 // loop_footer
      %s32 = sadd.s32 1, %s28
    $region7: #{tpu_custom_call.1} parent=1 // loop_footer_branch
      %27 = sbr.rel target = $region3
    $region8: #{tpu_custom_call.1} parent=1 // loop_exit
      _
    %1872 = vsyncpa [#allocation3], 1
    %s1873 = scalar_lea.sflag [#allocation3], 1
    %1874 = vsyncpa %s1873, 1
    %1875 = vsyncpa [#allocation5], 1
    %s1876 = scalar_lea.sflag [#allocation5], 1
    %1877 = vsyncpa %s1876, 1
    %1878 = vsyncpa [#allocation8], 1
    %s1879 = scalar_lea.sflag [#allocation8], 1
    %1880 = vsyncpa %s1879, 1

</llo_original>
